<compile_context>
chip_gen: v5e
topology: v5e:2x2
jax: 0.10.0
libtpu: 0.0.40
codegen_flags: <defaults>
</compile_context>

<pallas_src>
import jax
import jax.numpy as jnp
from jax.experimental import pallas as pl
from jax.experimental.pallas import tpu as pltpu

LANES = 128      # lane-dense output width; real result is column 0
ROW_TILE = 128   # batch rows per grid step once batching makes a grid pay off


# ----------------------------------------------------------------------------
# Fused kernel: stand-in stem projection (VPU FMA) + full fc head
# ----------------------------------------------------------------------------
def head_kernel(feats_ref, pack_ref, w0_ref, w1_ref, b2_ref, o_ref):
    feats = feats_ref[...]                       # (tB, C)  f32 pooled features
    pack = pack_ref[...]                         # (C+4, 1024) f32 packed slab
    C = feats.shape[1]

    # Stand-in classifier stem (K = C = 4 contraction) as a VPU broadcast-FMA
    # in f32 (review: a K=4 MXU dot wastes a weight-push for 4 MAC rows).
    h = pack[C:C + 1, :]                                    # bs      (1, 1024)
    for c in range(C):                                      # static unroll
        h = h + feats[:, c:c + 1] * pack[c:c + 1, :]        # (tB, 1024)

    # fc[0]: Linear(1000->512) on zero-padded 1024 cols (exact numerics),
    # Dropout(eval) = identity, ReLU.
    h = jnp.dot(h.astype(jnp.bfloat16), w0_ref[...],
                preferred_element_type=jnp.float32)         # (tB, 512)
    h = jnp.maximum(h + pack[C + 1:C + 2, :512], 0.0)

    # fc[3]: Linear(512->256), Dropout(eval) = identity, ReLU.
    h = jnp.dot(h.astype(jnp.bfloat16), w1_ref[...],
                preferred_element_type=jnp.float32)         # (tB, 256)
    h = jnp.maximum(h + pack[C + 2:C + 3, :256], 0.0)

    # fc[6]: Linear(256->1) as VPU multiply + cross-lane reduce (no N=1 MXU
    # pass); lane-dense (tB, 128) store, sliced to column 0 wrapper-side.
    red = jnp.sum(h * pack[C + 3:C + 4, :256], axis=-1, keepdims=True)
    o_ref[...] = jnp.broadcast_to(red + b2_ref[0], o_ref.shape)


# ----------------------------------------------------------------------------
# Wrapper
# ----------------------------------------------------------------------------
def fused_forward(x, params):
    B, C, H, W = x.shape
    pack, w0, w1, b2 = params

    # Global average pool wrapper-side (XLA fuses it; it belongs to the
    # untranslated backbone stand-in anyway) -> kernel input is 128 B, not 32 KB.
    feats = jnp.mean(x.reshape(B, C, H * W).astype(jnp.float32), axis=-1)

    if B <= ROW_TILE:
        # Small batch: grid-less single block (review: keep grid=() at Bp=8).
        Bp = ((B + 7) // 8) * 8
        tB = Bp
        grid_kwargs = {}
        bmap = lambda: (0, 0)
        wmap = lambda: (0, 0)
    else:
        # Large batch: shard 128-row tiles across TensorCores; weights stay
        # resident (constant index_map -> no per-step re-DMA).
        Bp = ((B + ROW_TILE - 1) // ROW_TILE) * ROW_TILE
        tB = ROW_TILE
        grid_kwargs = dict(
            grid=(Bp // ROW_TILE,),
            compiler_params=pltpu.CompilerParams(
                dimension_semantics=("parallel",)))
        bmap = lambda i: (i, 0)
        wmap = lambda i: (0, 0)

    feats_p = jnp.pad(feats, ((0, Bp - B), (0, 0)))

    flops = 2 * Bp * (C * 1024 + 1024 * 512 + 512 * 256 + 256)
    bytes_accessed = (feats_p.size * 4 + pack.size * 4 + w0.size * 2
                      + w1.size * 2 + 4 + Bp * LANES * 4)

    out = pl.pallas_call(
        head_kernel,
        out_shape=jax.ShapeDtypeStruct((Bp, LANES), jnp.float32),
        in_specs=[
            pl.BlockSpec((tB, C), bmap),                            # feats
            pl.BlockSpec(pack.shape, wmap),                         # packed slab
            pl.BlockSpec(w0.shape, wmap),                           # w0 bf16
            pl.BlockSpec(w1.shape, wmap),                           # w1 bf16
            pl.BlockSpec(memory_space=pltpu.MemorySpace.SMEM),      # b2 scalar
        ],
        out_specs=pl.BlockSpec((tB, LANES), bmap),
        cost_estimate=pl.CostEstimate(flops=int(flops), transcendentals=0,
                                      bytes_accessed=int(bytes_accessed)),
        **grid_kwargs,
    )(feats_p, pack, w0, w1, b2)
    return out[:B, :1]                           # (B, 1)


# ----------------------------------------------------------------------------
# Parameter construction (deterministic stand-in for pretrained weights)
# ----------------------------------------------------------------------------
def init_params(key, in_channels):
    def linear(k, din, dout):
        kw, kb = jax.random.split(k)
        scale = 1.0 / jnp.sqrt(jnp.float32(din))
        w = jax.random.uniform(kw, (din, dout), jnp.float32, -scale, scale)
        b = jax.random.uniform(kb, (dout,), jnp.float32, -scale, scale)
        return w, b

    k0, k1, k2, k3 = jax.random.split(key, 4)
    ws, bs = linear(k0, in_channels, 1000)   # stand-in classifier -> 1000 logits
    w0, b0 = linear(k1, 1000, 512)           # fc[0]
    w1, b1 = linear(k2, 512, 256)            # fc[3]
    w2, b2 = linear(k3, 256, 1)              # fc[6]

    D = 1024  # ragged 1000 zero-padded to a clean 128-multiple (exact numerics)

    # Packed small-operand slab: one DMA / one VMEM buffer.
    # Rows: [ws_0 .. ws_{C-1}, bs, b0, b1, w2_row], all f32 (VPU path).
    pack = jnp.zeros((in_channels + 4, D), jnp.float32)
    pack = pack.at[:in_channels, :1000].set(ws)
    pack = pack.at[in_channels, :1000].set(bs)
    pack = pack.at[in_channels + 1, :512].set(b0)
    pack = pack.at[in_channels + 2, :256].set(b1)
    pack = pack.at[in_channels + 3, :256].set(w2[:, 0])

    # Matmul weights in bf16 (MXU-native, halves weight DMA). Zero-padded w0
    # rows match the zero-padded stem columns -> numerics unchanged.
    w0p = jnp.zeros((D, 512), jnp.float32).at[:1000, :].set(w0)
    return (pack, w0p.astype(jnp.bfloat16), w1.astype(jnp.bfloat16), b2)


@jax.jit
def model_forward(x, params):
    return fused_forward(x, params)


if __name__ == "__main__":
    key = jax.random.PRNGKey(0)
    kx, kp = jax.random.split(key)

    B, C, H, W = 2, 4, 16, 16
    x = jax.random.normal(kx, (B, C, H, W), jnp.float32)
    params = init_params(kp, C)

    out = model_forward(x, params)
    jax.block_until_ready(out)
    assert out.shape == (B, 1), out.shape
    print("KERNEL_OK")
</pallas_src>

<mosaic_0001>
module attributes {stable_mosaic.version = 11 : i64} {
  func.func @head_kernel(%arg0: memref<8x4xf32, #tpu.memory_space<vmem>>, %arg1: memref<8x1024xf32, #tpu.memory_space<vmem>>, %arg2: memref<1024x512xbf16, #tpu.memory_space<vmem>>, %arg3: memref<512x256xbf16, #tpu.memory_space<vmem>>, %arg4: memref<1xf32, #tpu.memory_space<smem>>, %arg5: memref<8x128xf32, #tpu.memory_space<vmem>>) attributes {dimension_semantics = [], scalar_prefetch = 0 : i64, scratch_operands = 0 : i64, tpu.core_type = #tpu.core_type<tc>} {
    %c0 = arith.constant 0 : index
    %c0_0 = arith.constant 0 : index
    %0 = vector.load %arg0[%c0, %c0_0] : memref<8x4xf32, #tpu.memory_space<vmem>>, vector<8x4xf32>
    %c0_1 = arith.constant 0 : index
    %c0_2 = arith.constant 0 : index
    %1 = vector.load %arg1[%c0_1, %c0_2] : memref<8x1024xf32, #tpu.memory_space<vmem>>, vector<8x1024xf32>
    %2 = vector.extract_strided_slice %1 {offsets = [4, 0], sizes = [1, 1024], strides = [1, 1]} : vector<8x1024xf32> to vector<1x1024xf32>
    %3 = vector.extract_strided_slice %0 {offsets = [0, 0], sizes = [8, 1], strides = [1, 1]} : vector<8x4xf32> to vector<8x1xf32>
    %4 = vector.extract_strided_slice %1 {offsets = [0, 0], sizes = [1, 1024], strides = [1, 1]} : vector<8x1024xf32> to vector<1x1024xf32>
    %5 = vector.broadcast %3 : vector<8x1xf32> to vector<8x1024xf32>
    %6 = vector.broadcast %4 : vector<1x1024xf32> to vector<8x1024xf32>
    %7 = arith.mulf %5, %6 : vector<8x1024xf32>
    %8 = vector.broadcast %2 : vector<1x1024xf32> to vector<8x1024xf32>
    %9 = arith.addf %8, %7 : vector<8x1024xf32>
    %10 = vector.extract_strided_slice %0 {offsets = [0, 1], sizes = [8, 1], strides = [1, 1]} : vector<8x4xf32> to vector<8x1xf32>
    %11 = vector.extract_strided_slice %1 {offsets = [1, 0], sizes = [1, 1024], strides = [1, 1]} : vector<8x1024xf32> to vector<1x1024xf32>
    %12 = vector.broadcast %10 : vector<8x1xf32> to vector<8x1024xf32>
    %13 = vector.broadcast %11 : vector<1x1024xf32> to vector<8x1024xf32>
    %14 = arith.mulf %12, %13 : vector<8x1024xf32>
    %15 = arith.addf %9, %14 : vector<8x1024xf32>
    %16 = vector.extract_strided_slice %0 {offsets = [0, 2], sizes = [8, 1], strides = [1, 1]} : vector<8x4xf32> to vector<8x1xf32>
    %17 = vector.extract_strided_slice %1 {offsets = [2, 0], sizes = [1, 1024], strides = [1, 1]} : vector<8x1024xf32> to vector<1x1024xf32>
    %18 = vector.broadcast %16 : vector<8x1xf32> to vector<8x1024xf32>
    %19 = vector.broadcast %17 : vector<1x1024xf32> to vector<8x1024xf32>
    %20 = arith.mulf %18, %19 : vector<8x1024xf32>
    %21 = arith.addf %15, %20 : vector<8x1024xf32>
    %22 = vector.extract_strided_slice %0 {offsets = [0, 3], sizes = [8, 1], strides = [1, 1]} : vector<8x4xf32> to vector<8x1xf32>
    %23 = vector.extract_strided_slice %1 {offsets = [3, 0], sizes = [1, 1024], strides = [1, 1]} : vector<8x1024xf32> to vector<1x1024xf32>
    %24 = vector.broadcast %22 : vector<8x1xf32> to vector<8x1024xf32>
    %25 = vector.broadcast %23 : vector<1x1024xf32> to vector<8x1024xf32>
    %26 = arith.mulf %24, %25 : vector<8x1024xf32>
    %27 = arith.addf %21, %26 : vector<8x1024xf32>
    %28 = arith.truncf %27 : vector<8x1024xf32> to vector<8x1024xbf16>
    %c0_3 = arith.constant 0 : index
    %c0_4 = arith.constant 0 : index
    %29 = vector.load %arg2[%c0_3, %c0_4] : memref<1024x512xbf16, #tpu.memory_space<vmem>>, vector<1024x512xbf16>
    %cst = arith.constant dense<0.000000e+00> : vector<8x512xf32>
    %30 = tpu.matmul %28, %29, %cst {dimension_numbers = #tpu.dot_dimension_numbers<[1], [0], [0], [1], [0, 0, 1, 1], [], []>} : vector<8x1024xbf16>, vector<1024x512xbf16>, vector<8x512xf32> -> vector<8x512xf32>
    %31 = vector.extract_strided_slice %1 {offsets = [5, 0], sizes = [1, 512], strides = [1, 1]} : vector<8x1024xf32> to vector<1x512xf32>
    %32 = vector.broadcast %31 : vector<1x512xf32> to vector<8x512xf32>
    %33 = arith.addf %30, %32 : vector<8x512xf32>
    %cst_5 = arith.constant 0.000000e+00 : f32
    %34 = vector.broadcast %cst_5 : f32 to vector<8x512xf32>
    %35 = arith.maximumf %33, %34 : vector<8x512xf32>
    %36 = arith.truncf %35 : vector<8x512xf32> to vector<8x512xbf16>
    %c0_6 = arith.constant 0 : index
    %c0_7 = arith.constant 0 : index
    %37 = vector.load %arg3[%c0_6, %c0_7] : memref<512x256xbf16, #tpu.memory_space<vmem>>, vector<512x256xbf16>
    %cst_8 = arith.constant dense<0.000000e+00> : vector<8x256xf32>
    %38 = tpu.matmul %36, %37, %cst_8 {dimension_numbers = #tpu.dot_dimension_numbers<[1], [0], [0], [1], [0, 0, 1, 1], [], []>} : vector<8x512xbf16>, vector<512x256xbf16>, vector<8x256xf32> -> vector<8x256xf32>
    %39 = vector.extract_strided_slice %1 {offsets = [6, 0], sizes = [1, 256], strides = [1, 1]} : vector<8x1024xf32> to vector<1x256xf32>
    %40 = vector.broadcast %39 : vector<1x256xf32> to vector<8x256xf32>
    %41 = arith.addf %38, %40 : vector<8x256xf32>
    %cst_9 = arith.constant 0.000000e+00 : f32
    %42 = vector.broadcast %cst_9 : f32 to vector<8x256xf32>
    %43 = arith.maximumf %41, %42 : vector<8x256xf32>
    %44 = vector.extract_strided_slice %1 {offsets = [7, 0], sizes = [1, 256], strides = [1, 1]} : vector<8x1024xf32> to vector<1x256xf32>
    %45 = vector.broadcast %44 : vector<1x256xf32> to vector<8x256xf32>
    %46 = arith.mulf %43, %45 : vector<8x256xf32>
    %cst_10 = arith.constant dense<0.000000e+00> : vector<8xf32>
    %47 = vector.multi_reduction <add>, %46, %cst_10 [1] : vector<8x256xf32> to vector<8xf32>
    %48 = vector.shape_cast %47 : vector<8xf32> to vector<8x1xf32>
    %c0_11 = arith.constant 0 : index
    %49 = memref.load %arg4[%c0_11] : memref<1xf32, #tpu.memory_space<smem>>
    %50 = vector.broadcast %49 : f32 to vector<8x1xf32>
    %51 = arith.addf %48, %50 : vector<8x1xf32>
    %52 = vector.shape_cast %51 : vector<8x1xf32> to vector<8x1xf32>
    %53 = vector.broadcast %52 : vector<8x1xf32> to vector<8x128xf32>
    %c0_12 = arith.constant 0 : index
    %c0_13 = arith.constant 0 : index
    %54 = vector.load %arg5[%c0_12, %c0_13] : memref<8x128xf32, #tpu.memory_space<vmem>>, vector<8x128xf32>
    tpu.vector_store %arg5[%c0_12, %c0_13], %53 {strides = array<i32>} : memref<8x128xf32, #tpu.memory_space<vmem>>, vector<8x128xf32>,
    return
  }
}

</mosaic_0001>

<llo_original>
// kernel: model_forward.1
$region0: #{model_forward.1}
  #allocation0 [shape = 'u32[]', space=smem, size = 0x4, offset = 0x4, fixed_abs, tag = 'smem constant byte address 0x4 - core index']
  #allocation1 [shape = 'u32[72,128]{1,0:T(1,128)}', space=vmem, size = 0x9000, scoped, tag = 'internal scratch']
  #allocation2 [shape = 'f32[1]{0:T(128)S(6)}', space=smem, size = 0x200, scoped, tag = 'scoped memory for model_forward.1']
  %s0 = inlined_call_operand.vmem [shape: f32[8,4], index: 0, kind: input, shape index: {}]
  %s1 = inlined_call_operand.vmem [shape: f32[8,1024], index: 1, kind: input, shape index: {}]
  %s2 = inlined_call_operand.hbm [shape: bf16[1024,512], index: 2, kind: input, shape index: {}]
  %s3 = inlined_call_operand.hbm [shape: bf16[512,256], index: 3, kind: input, shape index: {}]
  %s4 = inlined_call_operand.<no memory space> [shape: f32[1], index: 4, kind: input, shape index: {}]
  %s5 = inlined_call_operand.vmem [shape: f32[8,128], index: 5, kind: output, shape index: {}]
  %s6 = sld [smem:[#allocation0]]
  $region38: #{model_forward.1} parent=0
    _
  %s8 = ssub.s32 1, %s6
  %s9 = scalar_select 0, %s8, %s6
  %10 = sst [smem:[#allocation2]] %s4
  $region1: #{model_forward.1} parent=0
    #allocation3 [shape = 'u8[1048576]{0}', space=vmem, size = 0x100000, scoped, tag = 'input window, operand 2, single buffered']
    #allocation4 [shape = 's32[1]{0}', space=sflag, size = 0x4, scoped, tag = 'scoped memory for model_forward.1']
    #allocation5 [shape = 'u8[262144]{0}', space=vmem, size = 0x40000, scoped, tag = 'input window, operand 3, single buffered']
    #allocation6 [shape = 's32[1]{0}', space=sflag, size = 0x4, scoped, tag = 'scoped memory for model_forward.1']
    %11 = vsyncpa [#allocation4], 0
    %12 = vsyncpa [#allocation6], 0
    // Predicated region
    $region2: #{model_forward.1} parent=1 // pred_check
      _
    $region3: #{model_forward.1} parent=1 // pred_check_branch
      %14 = sbr.rel (0) target = $region5
    $region4: #{model_forward.1} parent=1 // pred_region
      _
    $region5: #{model_forward.1} parent=1 // pred_fallthru
      _
    // Predicated region
    $region6: #{model_forward.1} parent=1 // pred_check
      _
    $region7: #{model_forward.1} parent=1 // pred_check_branch
      %16 = sbr.rel (0) target = $region9
    $region8: #{model_forward.1} parent=1 // pred_region
      _
    $region9: #{model_forward.1} parent=1 // pred_fallthru
      _
    // Predicated region
    $region10: #{model_forward.1} parent=1 // pred_check
      _
    $region11: #{model_forward.1} parent=1 // pred_check_branch
      %18 = sbr.rel (0) target = $region13
    $region12: #{model_forward.1} parent=1 // pred_region
      %20 = vsyncadd [#allocation4], 0
      %s21 = sshll.u32 %s2, 4
      %s22 = int_to_ptr.hbm [resolvable:$true] %s21
      %s23 = sshll.u32 [#allocation3], 4
      %s24 = int_to_ptr.vmem [resolvable:$true] %s23
      %29 = dma.hbm_to_vmem [thread:$0]  %s22, 32768, %s24, [#allocation4], 256, 256, 16
    $region13: #{model_forward.1} parent=1 // pred_fallthru
      _
    // Predicated region
    $region14: #{model_forward.1} parent=1 // pred_check
      _
    $region15: #{model_forward.1} parent=1 // pred_check_branch
      %31 = sbr.rel (0) target = $region17
    $region16: #{model_forward.1} parent=1 // pred_region
      %33 = vsyncadd [#allocation6], 0
      %s34 = sshll.u32 %s3, 4
      %s35 = int_to_ptr.hbm [resolvable:$true] %s34
      %s36 = sshll.u32 [#allocation5], 4
      %s37 = int_to_ptr.vmem [resolvable:$true] %s36
      %42 = dma.hbm_to_vmem [thread:$0]  %s35, 8192, %s37, [#allocation6], 128, 128, 8
    $region17: #{model_forward.1} parent=1 // pred_fallthru
      _
    // Predicated region
    $region18: #{model_forward.1} parent=1 // pred_check
      _
    $region19: #{model_forward.1} parent=1 // pred_check_branch
      %44 = sbr.rel (0) target = $region21
    $region20: #{model_forward.1} parent=1 // pred_region
      _
    $region21: #{model_forward.1} parent=1 // pred_fallthru
      _
    // Predicated region
    $region22: #{model_forward.1} parent=1 // pred_check
      _
    $region23: #{model_forward.1} parent=1 // pred_check_branch
      %46 = sbr.rel (0) target = $region25
    $region24: #{model_forward.1} parent=1 // pred_region
      %48 = dma.done [#allocation4], 32768
    $region25: #{model_forward.1} parent=1 // pred_fallthru
      _
    // Predicated region
    $region26: #{model_forward.1} parent=1 // pred_check
      _
    $region27: #{model_forward.1} parent=1 // pred_check_branch
      %50 = sbr.rel (0) target = $region29
    $region28: #{model_forward.1} parent=1 // pred_region
      %52 = dma.done [#allocation6], 8192
    $region29: #{model_forward.1} parent=1 // pred_fallthru
      _
    %v53 = vld [vmem:[%s0] sm:$0xff]
    %v54 = vld [vmem:[%s1] sm:$0xff]
    %v55 = vld [vmem:[%s1 + $0x8] sm:$0xff]
    %v56 = vld [vmem:[%s1 + $0x10] sm:$0xff]
    %v57 = vld [vmem:[%s1 + $0x18] sm:$0xff]
    %v58 = vld [vmem:[%s1 + $0x20] sm:$0xff]
    %v59 = vld [vmem:[%s1 + $0x28] sm:$0xff]
    %v60 = vld [vmem:[%s1 + $0x30] sm:$0xff]
    %v61 = vld [vmem:[%s1 + $0x38] sm:$0xff]
    %63 = vset.pattern.permute.xlu0 0
    %64 = vperm.xlu0 %63, %v53
    %v65 = vpop.permute.xlu0 %64
    %v67 = vperm.slane %v54, 0
    %v68 = vperm.slane %v55, 0
    %v69 = vperm.slane %v56, 0
    %v70 = vperm.slane %v57, 0
    %v71 = vperm.slane %v58, 0
    %v72 = vperm.slane %v59, 0
    %v73 = vperm.slane %v60, 0
    %v74 = vperm.slane %v61, 0
    %v75 = vmul.f32 %v65, %v67
    %v76 = vmul.f32 %v65, %v68
    %v77 = vmul.f32 %v65, %v69
    %v78 = vmul.f32 %v65, %v70
    %v79 = vmul.f32 %v65, %v71
    %v80 = vmul.f32 %v65, %v72
    %v81 = vmul.f32 %v65, %v73
    %v82 = vmul.f32 %v65, %v74
    %v83 = vperm.slane %v54, 4
    %v84 = vperm.slane %v55, 4
    %v85 = vperm.slane %v56, 4
    %v86 = vperm.slane %v57, 4
    %v87 = vperm.slane %v58, 4
    %v88 = vperm.slane %v59, 4
    %v89 = vperm.slane %v60, 4
    %v90 = vperm.slane %v61, 4
    %v91 = vadd.f32 %v83, %v75
    %v92 = vadd.f32 %v84, %v76
    %v93 = vadd.f32 %v85, %v77
    %v94 = vadd.f32 %v86, %v78
    %v95 = vadd.f32 %v87, %v79
    %v96 = vadd.f32 %v88, %v80
    %v97 = vadd.f32 %v89, %v81
    %v98 = vadd.f32 %v90, %v82
    %99 = vset.pattern.permute.xlu0 1
    %100 = vperm.xlu0 %99, %v53
    %v101 = vpop.permute.xlu0 %100
    %v103 = vperm.slane %v54, 1
    %v104 = vperm.slane %v55, 1
    %v105 = vperm.slane %v56, 1
    %v106 = vperm.slane %v57, 1
    %v107 = vperm.slane %v58, 1
    %v108 = vperm.slane %v59, 1
    %v109 = vperm.slane %v60, 1
    %v110 = vperm.slane %v61, 1
    %v111 = vmul.f32 %v101, %v103
    %v112 = vmul.f32 %v101, %v104
    %v113 = vmul.f32 %v101, %v105
    %v114 = vmul.f32 %v101, %v106
    %v115 = vmul.f32 %v101, %v107
    %v116 = vmul.f32 %v101, %v108
    %v117 = vmul.f32 %v101, %v109
    %v118 = vmul.f32 %v101, %v110
    %v119 = vadd.f32 %v91, %v111
    %v120 = vadd.f32 %v92, %v112
    %v121 = vadd.f32 %v93, %v113
    %v122 = vadd.f32 %v94, %v114
    %v123 = vadd.f32 %v95, %v115
    %v124 = vadd.f32 %v96, %v116
    %v125 = vadd.f32 %v97, %v117
    %v126 = vadd.f32 %v98, %v118
    %127 = vset.pattern.permute.xlu0 2
    %128 = vperm.xlu0 %127, %v53
    %v129 = vpop.permute.xlu0 %128
    %v131 = vperm.slane %v54, 2
    %v132 = vperm.slane %v55, 2
    %v133 = vperm.slane %v56, 2
    %v134 = vperm.slane %v57, 2
    %v135 = vperm.slane %v58, 2
    %v136 = vperm.slane %v59, 2
    %v137 = vperm.slane %v60, 2
    %v138 = vperm.slane %v61, 2
    %v139 = vmul.f32 %v129, %v131
    %v140 = vmul.f32 %v129, %v132
    %v141 = vmul.f32 %v129, %v133
    %v142 = vmul.f32 %v129, %v134
    %v143 = vmul.f32 %v129, %v135
    %v144 = vmul.f32 %v129, %v136
    %v145 = vmul.f32 %v129, %v137
    %v146 = vmul.f32 %v129, %v138
    %v147 = vadd.f32 %v119, %v139
    %v148 = vadd.f32 %v120, %v140
    %v149 = vadd.f32 %v121, %v141
    %v150 = vadd.f32 %v122, %v142
    %v151 = vadd.f32 %v123, %v143
    %v152 = vadd.f32 %v124, %v144
    %v153 = vadd.f32 %v125, %v145
    %v154 = vadd.f32 %v126, %v146
    %155 = vset.pattern.permute.xlu0 3
    %156 = vperm.xlu0 %155, %v53
    %v157 = vpop.permute.xlu0 %156
    %v159 = vperm.slane %v54, 3
    %v160 = vperm.slane %v55, 3
    %v161 = vperm.slane %v56, 3
    %v162 = vperm.slane %v57, 3
    %v163 = vperm.slane %v58, 3
    %v164 = vperm.slane %v59, 3
    %v165 = vperm.slane %v60, 3
    %v166 = vperm.slane %v61, 3
    %v167 = vmul.f32 %v157, %v159
    %v168 = vmul.f32 %v157, %v160
    %v169 = vmul.f32 %v157, %v161
    %v170 = vmul.f32 %v157, %v162
    %v171 = vmul.f32 %v157, %v163
    %v172 = vmul.f32 %v157, %v164
    %v173 = vmul.f32 %v157, %v165
    %v174 = vmul.f32 %v157, %v166
    %v175 = vadd.f32 %v147, %v167
    %v176 = vadd.f32 %v148, %v168
    %v177 = vadd.f32 %v149, %v169
    %v178 = vadd.f32 %v150, %v170
    %v179 = vadd.f32 %v151, %v171
    %v180 = vadd.f32 %v152, %v172
    %v181 = vadd.f32 %v153, %v173
    %v182 = vadd.f32 %v154, %v174
    %v183 = vpack.c.bf16 %v175, %v175
    %v184 = vpack.c.bf16 %v176, %v176
    %v185 = vpack.c.bf16 %v177, %v177
    %v186 = vpack.c.bf16 %v178, %v178
    %v187 = vpack.c.bf16 %v179, %v179
    %v188 = vpack.c.bf16 %v180, %v180
    %v189 = vpack.c.bf16 %v181, %v181
    %v190 = vpack.c.bf16 %v182, %v182
    %v191 = vld [vmem:[#allocation3] sm:$0xff]
    %v192 = vld [vmem:[#allocation3 + $0x8] sm:$0xff]
    %v193 = vld [vmem:[#allocation3 + $0x10] sm:$0xff]
    %v194 = vld [vmem:[#allocation3 + $0x18] sm:$0xff]
    %v195 = vld [vmem:[#allocation3 + $0x20] sm:$0xff]
    %v196 = vld [vmem:[#allocation3 + $0x28] sm:$0xff]
    %v197 = vld [vmem:[#allocation3 + $0x30] sm:$0xff]
    %v198 = vld [vmem:[#allocation3 + $0x38] sm:$0xff]
    %v199 = vld [vmem:[#allocation3 + $0x40] sm:$0xff]
    %v200 = vld [vmem:[#allocation3 + $0x48] sm:$0xff]
    %v201 = vld [vmem:[#allocation3 + $0x50] sm:$0xff]
    %v202 = vld [vmem:[#allocation3 + $0x58] sm:$0xff]
    %v203 = vld [vmem:[#allocation3 + $0x60] sm:$0xff]
    %v204 = vld [vmem:[#allocation3 + $0x68] sm:$0xff]
    %v205 = vld [vmem:[#allocation3 + $0x70] sm:$0xff]
    %v206 = vld [vmem:[#allocation3 + $0x78] sm:$0xff]
    %v207 = vld [vmem:[#allocation3 + $0x80] sm:$0xff]
    %v208 = vld [vmem:[#allocation3 + $0x88] sm:$0xff]
    %v209 = vld [vmem:[#allocation3 + $0x90] sm:$0xff]
    %v210 = vld [vmem:[#allocation3 + $0x98] sm:$0xff]
    %v211 = vld [vmem:[#allocation3 + $0xa0] sm:$0xff]
    %v212 = vld [vmem:[#allocation3 + $0xa8] sm:$0xff]
    %v213 = vld [vmem:[#allocation3 + $0xb0] sm:$0xff]
    %v214 = vld [vmem:[#allocation3 + $0xb8] sm:$0xff]
    %v215 = vld [vmem:[#allocation3 + $0xc0] sm:$0xff]
    %v216 = vld [vmem:[#allocation3 + $0xc8] sm:$0xff]
    %v217 = vld [vmem:[#allocation3 + $0xd0] sm:$0xff]
    %v218 = vld [vmem:[#allocation3 + $0xd8] sm:$0xff]
    %v219 = vld [vmem:[#allocation3 + $0xe0] sm:$0xff]
    %v220 = vld [vmem:[#allocation3 + $0xe8] sm:$0xff]
    %v221 = vld [vmem:[#allocation3 + $0xf0] sm:$0xff]
    %v222 = vld [vmem:[#allocation3 + $0xf8] sm:$0xff]
    %v223 = vld [vmem:[#allocation3 + $0x100] sm:$0xff]
    %v224 = vld [vmem:[#allocation3 + $0x108] sm:$0xff]
    %v225 = vld [vmem:[#allocation3 + $0x110] sm:$0xff]
    %v226 = vld [vmem:[#allocation3 + $0x118] sm:$0xff]
    %v227 = vld [vmem:[#allocation3 + $0x120] sm:$0xff]
    %v228 = vld [vmem:[#allocation3 + $0x128] sm:$0xff]
    %v229 = vld [vmem:[#allocation3 + $0x130] sm:$0xff]
    %v230 = vld [vmem:[#allocation3 + $0x138] sm:$0xff]
    %v231 = vld [vmem:[#allocation3 + $0x140] sm:$0xff]
    %v232 = vld [vmem:[#allocation3 + $0x148] sm:$0xff]
    %v233 = vld [vmem:[#allocation3 + $0x150] sm:$0xff]
    %v234 = vld [vmem:[#allocation3 + $0x158] sm:$0xff]
    %v235 = vld [vmem:[#allocation3 + $0x160] sm:$0xff]
    %v236 = vld [vmem:[#allocation3 + $0x168] sm:$0xff]
    %v237 = vld [vmem:[#allocation3 + $0x170] sm:$0xff]
    %v238 = vld [vmem:[#allocation3 + $0x178] sm:$0xff]
    %v239 = vld [vmem:[#allocation3 + $0x180] sm:$0xff]
    %v240 = vld [vmem:[#allocation3 + $0x188] sm:$0xff]
    %v241 = vld [vmem:[#allocation3 + $0x190] sm:$0xff]
    %v242 = vld [vmem:[#allocation3 + $0x198] sm:$0xff]
    %v243 = vld [vmem:[#allocation3 + $0x1a0] sm:$0xff]
    %v244 = vld [vmem:[#allocation3 + $0x1a8] sm:$0xff]
    %v245 = vld [vmem:[#allocation3 + $0x1b0] sm:$0xff]
    %v246 = vld [vmem:[#allocation3 + $0x1b8] sm:$0xff]
    %v247 = vld [vmem:[#allocation3 + $0x1c0] sm:$0xff]
    %v248 = vld [vmem:[#allocation3 + $0x1c8] sm:$0xff]
    %v249 = vld [vmem:[#allocation3 + $0x1d0] sm:$0xff]
    %v250 = vld [vmem:[#allocation3 + $0x1d8] sm:$0xff]
    %v251 = vld [vmem:[#allocation3 + $0x1e0] sm:$0xff]
    %v252 = vld [vmem:[#allocation3 + $0x1e8] sm:$0xff]
    %v253 = vld [vmem:[#allocation3 + $0x1f0] sm:$0xff]
    %v254 = vld [vmem:[#allocation3 + $0x1f8] sm:$0xff]
    %v255 = vld [vmem:[#allocation3 + $0x200] sm:$0xff]
    %v256 = vld [vmem:[#allocation3 + $0x208] sm:$0xff]
    %v257 = vld [vmem:[#allocation3 + $0x210] sm:$0xff]
    %v258 = vld [vmem:[#allocation3 + $0x218] sm:$0xff]
    %v259 = vld [vmem:[#allocation3 + $0x220] sm:$0xff]
    %v260 = vld [vmem:[#allocation3 + $0x228] sm:$0xff]
    %v261 = vld [vmem:[#allocation3 + $0x230] sm:$0xff]
    %v262 = vld [vmem:[#allocation3 + $0x238] sm:$0xff]
    %v263 = vld [vmem:[#allocation3 + $0x240] sm:$0xff]
    %v264 = vld [vmem:[#allocation3 + $0x248] sm:$0xff]
    %v265 = vld [vmem:[#allocation3 + $0x250] sm:$0xff]
    %v266 = vld [vmem:[#allocation3 + $0x258] sm:$0xff]
    %v267 = vld [vmem:[#allocation3 + $0x260] sm:$0xff]
    %v268 = vld [vmem:[#allocation3 + $0x268] sm:$0xff]
    %v269 = vld [vmem:[#allocation3 + $0x270] sm:$0xff]
    %v270 = vld [vmem:[#allocation3 + $0x278] sm:$0xff]
    %v271 = vld [vmem:[#allocation3 + $0x280] sm:$0xff]
    %v272 = vld [vmem:[#allocation3 + $0x288] sm:$0xff]
    %v273 = vld [vmem:[#allocation3 + $0x290] sm:$0xff]
    %v274 = vld [vmem:[#allocation3 + $0x298] sm:$0xff]
    %v275 = vld [vmem:[#allocation3 + $0x2a0] sm:$0xff]
    %v276 = vld [vmem:[#allocation3 + $0x2a8] sm:$0xff]
    %v277 = vld [vmem:[#allocation3 + $0x2b0] sm:$0xff]
    %v278 = vld [vmem:[#allocation3 + $0x2b8] sm:$0xff]
    %v279 = vld [vmem:[#allocation3 + $0x2c0] sm:$0xff]
    %v280 = vld [vmem:[#allocation3 + $0x2c8] sm:$0xff]
    %v281 = vld [vmem:[#allocation3 + $0x2d0] sm:$0xff]
    %v282 = vld [vmem:[#allocation3 + $0x2d8] sm:$0xff]
    %v283 = vld [vmem:[#allocation3 + $0x2e0] sm:$0xff]
    %v284 = vld [vmem:[#allocation3 + $0x2e8] sm:$0xff]
    %v285 = vld [vmem:[#allocation3 + $0x2f0] sm:$0xff]
    %v286 = vld [vmem:[#allocation3 + $0x2f8] sm:$0xff]
    %v287 = vld [vmem:[#allocation3 + $0x300] sm:$0xff]
    %v288 = vld [vmem:[#allocation3 + $0x308] sm:$0xff]
    %v289 = vld [vmem:[#allocation3 + $0x310] sm:$0xff]
    %v290 = vld [vmem:[#allocation3 + $0x318] sm:$0xff]
    %v291 = vld [vmem:[#allocation3 + $0x320] sm:$0xff]
    %v292 = vld [vmem:[#allocation3 + $0x328] sm:$0xff]
    %v293 = vld [vmem:[#allocation3 + $0x330] sm:$0xff]
    %v294 = vld [vmem:[#allocation3 + $0x338] sm:$0xff]
    %v295 = vld [vmem:[#allocation3 + $0x340] sm:$0xff]
    %v296 = vld [vmem:[#allocation3 + $0x348] sm:$0xff]
    %v297 = vld [vmem:[#allocation3 + $0x350] sm:$0xff]
    %v298 = vld [vmem:[#allocation3 + $0x358] sm:$0xff]
    %v299 = vld [vmem:[#allocation3 + $0x360] sm:$0xff]
    %v300 = vld [vmem:[#allocation3 + $0x368] sm:$0xff]
    %v301 = vld [vmem:[#allocation3 + $0x370] sm:$0xff]
    %v302 = vld [vmem:[#allocation3 + $0x378] sm:$0xff]
    %v303 = vld [vmem:[#allocation3 + $0x380] sm:$0xff]
    %v304 = vld [vmem:[#allocation3 + $0x388] sm:$0xff]
    %v305 = vld [vmem:[#allocation3 + $0x390] sm:$0xff]
    %v306 = vld [vmem:[#allocation3 + $0x398] sm:$0xff]
    %v307 = vld [vmem:[#allocation3 + $0x3a0] sm:$0xff]
    %v308 = vld [vmem:[#allocation3 + $0x3a8] sm:$0xff]
    %v309 = vld [vmem:[#allocation3 + $0x3b0] sm:$0xff]
    %v310 = vld [vmem:[#allocation3 + $0x3b8] sm:$0xff]
    %v311 = vld [vmem:[#allocation3 + $0x3c0] sm:$0xff]
    %v312 = vld [vmem:[#allocation3 + $0x3c8] sm:$0xff]
    %v313 = vld [vmem:[#allocation3 + $0x3d0] sm:$0xff]
    %v314 = vld [vmem:[#allocation3 + $0x3d8] sm:$0xff]
    %v315 = vld [vmem:[#allocation3 + $0x3e0] sm:$0xff]
    %v316 = vld [vmem:[#allocation3 + $0x3e8] sm:$0xff]
    %v317 = vld [vmem:[#allocation3 + $0x3f0] sm:$0xff]
    %v318 = vld [vmem:[#allocation3 + $0x3f8] sm:$0xff]
    %v319 = vld [vmem:[#allocation3 + $0x400] sm:$0xff]
    %v320 = vld [vmem:[#allocation3 + $0x408] sm:$0xff]
    %v321 = vld [vmem:[#allocation3 + $0x410] sm:$0xff]
    %v322 = vld [vmem:[#allocation3 + $0x418] sm:$0xff]
    %v323 = vld [vmem:[#allocation3 + $0x420] sm:$0xff]
    %v324 = vld [vmem:[#allocation3 + $0x428] sm:$0xff]
    %v325 = vld [vmem:[#allocation3 + $0x430] sm:$0xff]
    %v326 = vld [vmem:[#allocation3 + $0x438] sm:$0xff]
    %v327 = vld [vmem:[#allocation3 + $0x440] sm:$0xff]
    %v328 = vld [vmem:[#allocation3 + $0x448] sm:$0xff]
    %v329 = vld [vmem:[#allocation3 + $0x450] sm:$0xff]
    %v330 = vld [vmem:[#allocation3 + $0x458] sm:$0xff]
    %v331 = vld [vmem:[#allocation3 + $0x460] sm:$0xff]
    %v332 = vld [vmem:[#allocation3 + $0x468] sm:$0xff]
    %v333 = vld [vmem:[#allocation3 + $0x470] sm:$0xff]
    %v334 = vld [vmem:[#allocation3 + $0x478] sm:$0xff]
    %v335 = vld [vmem:[#allocation3 + $0x480] sm:$0xff]
    %v336 = vld [vmem:[#allocation3 + $0x488] sm:$0xff]
    %v337 = vld [vmem:[#allocation3 + $0x490] sm:$0xff]
    %v338 = vld [vmem:[#allocation3 + $0x498] sm:$0xff]
    %v339 = vld [vmem:[#allocation3 + $0x4a0] sm:$0xff]
    %v340 = vld [vmem:[#allocation3 + $0x4a8] sm:$0xff]
    %v341 = vld [vmem:[#allocation3 + $0x4b0] sm:$0xff]
    %v342 = vld [vmem:[#allocation3 + $0x4b8] sm:$0xff]
    %v343 = vld [vmem:[#allocation3 + $0x4c0] sm:$0xff]
    %v344 = vld [vmem:[#allocation3 + $0x4c8] sm:$0xff]
    %v345 = vld [vmem:[#allocation3 + $0x4d0] sm:$0xff]
    %v346 = vld [vmem:[#allocation3 + $0x4d8] sm:$0xff]
    %v347 = vld [vmem:[#allocation3 + $0x4e0] sm:$0xff]
    %v348 = vld [vmem:[#allocation3 + $0x4e8] sm:$0xff]
    %v349 = vld [vmem:[#allocation3 + $0x4f0] sm:$0xff]
    %v350 = vld [vmem:[#allocation3 + $0x4f8] sm:$0xff]
    %v351 = vld [vmem:[#allocation3 + $0x500] sm:$0xff]
    %v352 = vld [vmem:[#allocation3 + $0x508] sm:$0xff]
    %v353 = vld [vmem:[#allocation3 + $0x510] sm:$0xff]
    %v354 = vld [vmem:[#allocation3 + $0x518] sm:$0xff]
    %v355 = vld [vmem:[#allocation3 + $0x520] sm:$0xff]
    %v356 = vld [vmem:[#allocation3 + $0x528] sm:$0xff]
    %v357 = vld [vmem:[#allocation3 + $0x530] sm:$0xff]
    %v358 = vld [vmem:[#allocation3 + $0x538] sm:$0xff]
    %v359 = vld [vmem:[#allocation3 + $0x540] sm:$0xff]
    %v360 = vld [vmem:[#allocation3 + $0x548] sm:$0xff]
    %v361 = vld [vmem:[#allocation3 + $0x550] sm:$0xff]
    %v362 = vld [vmem:[#allocation3 + $0x558] sm:$0xff]
    %v363 = vld [vmem:[#allocation3 + $0x560] sm:$0xff]
    %v364 = vld [vmem:[#allocation3 + $0x568] sm:$0xff]
    %v365 = vld [vmem:[#allocation3 + $0x570] sm:$0xff]
    %v366 = vld [vmem:[#allocation3 + $0x578] sm:$0xff]
    %v367 = vld [vmem:[#allocation3 + $0x580] sm:$0xff]
    %v368 = vld [vmem:[#allocation3 + $0x588] sm:$0xff]
    %v369 = vld [vmem:[#allocation3 + $0x590] sm:$0xff]
    %v370 = vld [vmem:[#allocation3 + $0x598] sm:$0xff]
    %v371 = vld [vmem:[#allocation3 + $0x5a0] sm:$0xff]
    %v372 = vld [vmem:[#allocation3 + $0x5a8] sm:$0xff]
    %v373 = vld [vmem:[#allocation3 + $0x5b0] sm:$0xff]
    %v374 = vld [vmem:[#allocation3 + $0x5b8] sm:$0xff]
    %v375 = vld [vmem:[#allocation3 + $0x5c0] sm:$0xff]
    %v376 = vld [vmem:[#allocation3 + $0x5c8] sm:$0xff]
    %v377 = vld [vmem:[#allocation3 + $0x5d0] sm:$0xff]
    %v378 = vld [vmem:[#allocation3 + $0x5d8] sm:$0xff]
    %v379 = vld [vmem:[#allocation3 + $0x5e0] sm:$0xff]
    %v380 = vld [vmem:[#allocation3 + $0x5e8] sm:$0xff]
    %v381 = vld [vmem:[#allocation3 + $0x5f0] sm:$0xff]
    %v382 = vld [vmem:[#allocation3 + $0x5f8] sm:$0xff]
    %v383 = vld [vmem:[#allocation3 + $0x600] sm:$0xff]
    %v384 = vld [vmem:[#allocation3 + $0x608] sm:$0xff]
    %v385 = vld [vmem:[#allocation3 + $0x610] sm:$0xff]
    %v386 = vld [vmem:[#allocation3 + $0x618] sm:$0xff]
    %v387 = vld [vmem:[#allocation3 + $0x620] sm:$0xff]
    %v388 = vld [vmem:[#allocation3 + $0x628] sm:$0xff]
    %v389 = vld [vmem:[#allocation3 + $0x630] sm:$0xff]
    %v390 = vld [vmem:[#allocation3 + $0x638] sm:$0xff]
    %v391 = vld [vmem:[#allocation3 + $0x640] sm:$0xff]
    %v392 = vld [vmem:[#allocation3 + $0x648] sm:$0xff]
    %v393 = vld [vmem:[#allocation3 + $0x650] sm:$0xff]
    %v394 = vld [vmem:[#allocation3 + $0x658] sm:$0xff]
    %v395 = vld [vmem:[#allocation3 + $0x660] sm:$0xff]
    %v396 = vld [vmem:[#allocation3 + $0x668] sm:$0xff]
    %v397 = vld [vmem:[#allocation3 + $0x670] sm:$0xff]
    %v398 = vld [vmem:[#allocation3 + $0x678] sm:$0xff]
    %v399 = vld [vmem:[#allocation3 + $0x680] sm:$0xff]
    %v400 = vld [vmem:[#allocation3 + $0x688] sm:$0xff]
    %v401 = vld [vmem:[#allocation3 + $0x690] sm:$0xff]
    %v402 = vld [vmem:[#allocation3 + $0x698] sm:$0xff]
    %v403 = vld [vmem:[#allocation3 + $0x6a0] sm:$0xff]
    %v404 = vld [vmem:[#allocation3 + $0x6a8] sm:$0xff]
    %v405 = vld [vmem:[#allocation3 + $0x6b0] sm:$0xff]
    %v406 = vld [vmem:[#allocation3 + $0x6b8] sm:$0xff]
    %v407 = vld [vmem:[#allocation3 + $0x6c0] sm:$0xff]
    %v408 = vld [vmem:[#allocation3 + $0x6c8] sm:$0xff]
    %v409 = vld [vmem:[#allocation3 + $0x6d0] sm:$0xff]
    %v410 = vld [vmem:[#allocation3 + $0x6d8] sm:$0xff]
    %v411 = vld [vmem:[#allocation3 + $0x6e0] sm:$0xff]
    %v412 = vld [vmem:[#allocation3 + $0x6e8] sm:$0xff]
    %v413 = vld [vmem:[#allocation3 + $0x6f0] sm:$0xff]
    %v414 = vld [vmem:[#allocation3 + $0x6f8] sm:$0xff]
    %v415 = vld [vmem:[#allocation3 + $0x700] sm:$0xff]
    %v416 = vld [vmem:[#allocation3 + $0x708] sm:$0xff]
    %v417 = vld [vmem:[#allocation3 + $0x710] sm:$0xff]
    %v418 = vld [vmem:[#allocation3 + $0x718] sm:$0xff]
    %v419 = vld [vmem:[#allocation3 + $0x720] sm:$0xff]
    %v420 = vld [vmem:[#allocation3 + $0x728] sm:$0xff]
    %v421 = vld [vmem:[#allocation3 + $0x730] sm:$0xff]
    %v422 = vld [vmem:[#allocation3 + $0x738] sm:$0xff]
    %v423 = vld [vmem:[#allocation3 + $0x740] sm:$0xff]
    %v424 = vld [vmem:[#allocation3 + $0x748] sm:$0xff]
    %v425 = vld [vmem:[#allocation3 + $0x750] sm:$0xff]
    %v426 = vld [vmem:[#allocation3 + $0x758] sm:$0xff]
    %v427 = vld [vmem:[#allocation3 + $0x760] sm:$0xff]
    %v428 = vld [vmem:[#allocation3 + $0x768] sm:$0xff]
    %v429 = vld [vmem:[#allocation3 + $0x770] sm:$0xff]
    %v430 = vld [vmem:[#allocation3 + $0x778] sm:$0xff]
    %v431 = vld [vmem:[#allocation3 + $0x780] sm:$0xff]
    %v432 = vld [vmem:[#allocation3 + $0x788] sm:$0xff]
    %v433 = vld [vmem:[#allocation3 + $0x790] sm:$0xff]
    %v434 = vld [vmem:[#allocation3 + $0x798] sm:$0xff]
    %v435 = vld [vmem:[#allocation3 + $0x7a0] sm:$0xff]
    %v436 = vld [vmem:[#allocation3 + $0x7a8] sm:$0xff]
    %v437 = vld [vmem:[#allocation3 + $0x7b0] sm:$0xff]
    %v438 = vld [vmem:[#allocation3 + $0x7b8] sm:$0xff]
    %v439 = vld [vmem:[#allocation3 + $0x7c0] sm:$0xff]
    %v440 = vld [vmem:[#allocation3 + $0x7c8] sm:$0xff]
    %v441 = vld [vmem:[#allocation3 + $0x7d0] sm:$0xff]
    %v442 = vld [vmem:[#allocation3 + $0x7d8] sm:$0xff]
    %v443 = vld [vmem:[#allocation3 + $0x7e0] sm:$0xff]
    %v444 = vld [vmem:[#allocation3 + $0x7e8] sm:$0xff]
    %v445 = vld [vmem:[#allocation3 + $0x7f0] sm:$0xff]
    %v446 = vld [vmem:[#allocation3 + $0x7f8] sm:$0xff]
    %v447 = vperm.slane %v54, 5
    %v448 = vperm.slane %v55, 5
    %v449 = vperm.slane %v56, 5
    %v450 = vperm.slane %v57, 5
    %v707 = vunpack.c.l.b16 %v191
    %v708 = vunpack.c.h.b16 %v191
    %v709 = vunpack.c.l.b16 %v192
    %v710 = vunpack.c.h.b16 %v192
    %v711 = vunpack.c.l.b16 %v193
    %v712 = vunpack.c.h.b16 %v193
    %v713 = vunpack.c.l.b16 %v194
    %v714 = vunpack.c.h.b16 %v194
    %v715 = vunpack.c.l.b16 %v195
    %v716 = vunpack.c.h.b16 %v195
    %v717 = vunpack.c.l.b16 %v196
    %v718 = vunpack.c.h.b16 %v196
    %v719 = vunpack.c.l.b16 %v197
    %v720 = vunpack.c.h.b16 %v197
    %v721 = vunpack.c.l.b16 %v198
    %v722 = vunpack.c.h.b16 %v198
    %v723 = vunpack.c.l.b16 %v199
    %v724 = vunpack.c.h.b16 %v199
    %v725 = vunpack.c.l.b16 %v200
    %v726 = vunpack.c.h.b16 %v200
    %v727 = vunpack.c.l.b16 %v201
    %v728 = vunpack.c.h.b16 %v201
    %v729 = vunpack.c.l.b16 %v202
    %v730 = vunpack.c.h.b16 %v202
    %v731 = vunpack.c.l.b16 %v203
    %v732 = vunpack.c.h.b16 %v203
    %v733 = vunpack.c.l.b16 %v204
    %v734 = vunpack.c.h.b16 %v204
    %v735 = vunpack.c.l.b16 %v205
    %v736 = vunpack.c.h.b16 %v205
    %v737 = vunpack.c.l.b16 %v206
    %v738 = vunpack.c.h.b16 %v206
    %v739 = vunpack.c.l.b16 %v207
    %v740 = vunpack.c.h.b16 %v207
    %v741 = vunpack.c.l.b16 %v208
    %v742 = vunpack.c.h.b16 %v208
    %v743 = vunpack.c.l.b16 %v209
    %v744 = vunpack.c.h.b16 %v209
    %v745 = vunpack.c.l.b16 %v210
    %v746 = vunpack.c.h.b16 %v210
    %v747 = vunpack.c.l.b16 %v211
    %v748 = vunpack.c.h.b16 %v211
    %v749 = vunpack.c.l.b16 %v212
    %v750 = vunpack.c.h.b16 %v212
    %v751 = vunpack.c.l.b16 %v213
    %v752 = vunpack.c.h.b16 %v213
    %v753 = vunpack.c.l.b16 %v214
    %v754 = vunpack.c.h.b16 %v214
    %v755 = vunpack.c.l.b16 %v215
    %v756 = vunpack.c.h.b16 %v215
    %v757 = vunpack.c.l.b16 %v216
    %v758 = vunpack.c.h.b16 %v216
    %v759 = vunpack.c.l.b16 %v217
    %v760 = vunpack.c.h.b16 %v217
    %v761 = vunpack.c.l.b16 %v218
    %v762 = vunpack.c.h.b16 %v218
    %v763 = vunpack.c.l.b16 %v219
    %v764 = vunpack.c.h.b16 %v219
    %v765 = vunpack.c.l.b16 %v220
    %v766 = vunpack.c.h.b16 %v220
    %v767 = vunpack.c.l.b16 %v221
    %v768 = vunpack.c.h.b16 %v221
    %v769 = vunpack.c.l.b16 %v222
    %v770 = vunpack.c.h.b16 %v222
    %v771 = vunpack.c.l.b16 %v223
    %v772 = vunpack.c.h.b16 %v223
    %v773 = vunpack.c.l.b16 %v224
    %v774 = vunpack.c.h.b16 %v224
    %v775 = vunpack.c.l.b16 %v225
    %v776 = vunpack.c.h.b16 %v225
    %v777 = vunpack.c.l.b16 %v226
    %v778 = vunpack.c.h.b16 %v226
    %v779 = vunpack.c.l.b16 %v227
    %v780 = vunpack.c.h.b16 %v227
    %v781 = vunpack.c.l.b16 %v228
    %v782 = vunpack.c.h.b16 %v228
    %v783 = vunpack.c.l.b16 %v229
    %v784 = vunpack.c.h.b16 %v229
    %v785 = vunpack.c.l.b16 %v230
    %v786 = vunpack.c.h.b16 %v230
    %v787 = vunpack.c.l.b16 %v231
    %v788 = vunpack.c.h.b16 %v231
    %v789 = vunpack.c.l.b16 %v232
    %v790 = vunpack.c.h.b16 %v232
    %v791 = vunpack.c.l.b16 %v233
    %v792 = vunpack.c.h.b16 %v233
    %v793 = vunpack.c.l.b16 %v234
    %v794 = vunpack.c.h.b16 %v234
    %v795 = vunpack.c.l.b16 %v235
    %v796 = vunpack.c.h.b16 %v235
    %v797 = vunpack.c.l.b16 %v236
    %v798 = vunpack.c.h.b16 %v236
    %v799 = vunpack.c.l.b16 %v237
    %v800 = vunpack.c.h.b16 %v237
    %v801 = vunpack.c.l.b16 %v238
    %v802 = vunpack.c.h.b16 %v238
    %v803 = vunpack.c.l.b16 %v239
    %v804 = vunpack.c.h.b16 %v239
    %v805 = vunpack.c.l.b16 %v240
    %v806 = vunpack.c.h.b16 %v240
    %v807 = vunpack.c.l.b16 %v241
    %v808 = vunpack.c.h.b16 %v241
    %v809 = vunpack.c.l.b16 %v242
    %v810 = vunpack.c.h.b16 %v242
    %v811 = vunpack.c.l.b16 %v243
    %v812 = vunpack.c.h.b16 %v243
    %v813 = vunpack.c.l.b16 %v244
    %v814 = vunpack.c.h.b16 %v244
    %v815 = vunpack.c.l.b16 %v245
    %v816 = vunpack.c.h.b16 %v245
    %v817 = vunpack.c.l.b16 %v246
    %v818 = vunpack.c.h.b16 %v246
    %v819 = vunpack.c.l.b16 %v247
    %v820 = vunpack.c.h.b16 %v247
    %v821 = vunpack.c.l.b16 %v248
    %v822 = vunpack.c.h.b16 %v248
    %v823 = vunpack.c.l.b16 %v249
    %v824 = vunpack.c.h.b16 %v249
    %v825 = vunpack.c.l.b16 %v250
    %v826 = vunpack.c.h.b16 %v250
    %v827 = vunpack.c.l.b16 %v251
    %v828 = vunpack.c.h.b16 %v251
    %v829 = vunpack.c.l.b16 %v252
    %v830 = vunpack.c.h.b16 %v252
    %v831 = vunpack.c.l.b16 %v253
    %v832 = vunpack.c.h.b16 %v253
    %v833 = vunpack.c.l.b16 %v254
    %v834 = vunpack.c.h.b16 %v254
    %v835 = vunpack.c.l.b16 %v255
    %v836 = vunpack.c.h.b16 %v255
    %v837 = vunpack.c.l.b16 %v256
    %v838 = vunpack.c.h.b16 %v256
    %v839 = vunpack.c.l.b16 %v257
    %v840 = vunpack.c.h.b16 %v257
    %v841 = vunpack.c.l.b16 %v258
    %v842 = vunpack.c.h.b16 %v258
    %v843 = vunpack.c.l.b16 %v259
    %v844 = vunpack.c.h.b16 %v259
    %v845 = vunpack.c.l.b16 %v260
    %v846 = vunpack.c.h.b16 %v260
    %v847 = vunpack.c.l.b16 %v261
    %v848 = vunpack.c.h.b16 %v261
    %v849 = vunpack.c.l.b16 %v262
    %v850 = vunpack.c.h.b16 %v262
    %v851 = vunpack.c.l.b16 %v263
    %v852 = vunpack.c.h.b16 %v263
    %v853 = vunpack.c.l.b16 %v264
    %v854 = vunpack.c.h.b16 %v264
    %v855 = vunpack.c.l.b16 %v265
    %v856 = vunpack.c.h.b16 %v265
    %v857 = vunpack.c.l.b16 %v266
    %v858 = vunpack.c.h.b16 %v266
    %v859 = vunpack.c.l.b16 %v267
    %v860 = vunpack.c.h.b16 %v267
    %v861 = vunpack.c.l.b16 %v268
    %v862 = vunpack.c.h.b16 %v268
    %v863 = vunpack.c.l.b16 %v269
    %v864 = vunpack.c.h.b16 %v269
    %v865 = vunpack.c.l.b16 %v270
    %v866 = vunpack.c.h.b16 %v270
    %v867 = vunpack.c.l.b16 %v271
    %v868 = vunpack.c.h.b16 %v271
    %v869 = vunpack.c.l.b16 %v272
    %v870 = vunpack.c.h.b16 %v272
    %v871 = vunpack.c.l.b16 %v273
    %v872 = vunpack.c.h.b16 %v273
    %v873 = vunpack.c.l.b16 %v274
    %v874 = vunpack.c.h.b16 %v274
    %v875 = vunpack.c.l.b16 %v275
    %v876 = vunpack.c.h.b16 %v275
    %v877 = vunpack.c.l.b16 %v276
    %v878 = vunpack.c.h.b16 %v276
    %v879 = vunpack.c.l.b16 %v277
    %v880 = vunpack.c.h.b16 %v277
    %v881 = vunpack.c.l.b16 %v278
    %v882 = vunpack.c.h.b16 %v278
    %v883 = vunpack.c.l.b16 %v279
    %v884 = vunpack.c.h.b16 %v279
    %v885 = vunpack.c.l.b16 %v280
    %v886 = vunpack.c.h.b16 %v280
    %v887 = vunpack.c.l.b16 %v281
    %v888 = vunpack.c.h.b16 %v281
    %v889 = vunpack.c.l.b16 %v282
    %v890 = vunpack.c.h.b16 %v282
    %v891 = vunpack.c.l.b16 %v283
    %v892 = vunpack.c.h.b16 %v283
    %v893 = vunpack.c.l.b16 %v284
    %v894 = vunpack.c.h.b16 %v284
    %v895 = vunpack.c.l.b16 %v285
    %v896 = vunpack.c.h.b16 %v285
    %v897 = vunpack.c.l.b16 %v286
    %v898 = vunpack.c.h.b16 %v286
    %v899 = vunpack.c.l.b16 %v287
    %v900 = vunpack.c.h.b16 %v287
    %v901 = vunpack.c.l.b16 %v288
    %v902 = vunpack.c.h.b16 %v288
    %v903 = vunpack.c.l.b16 %v289
    %v904 = vunpack.c.h.b16 %v289
    %v905 = vunpack.c.l.b16 %v290
    %v906 = vunpack.c.h.b16 %v290
    %v907 = vunpack.c.l.b16 %v291
    %v908 = vunpack.c.h.b16 %v291
    %v909 = vunpack.c.l.b16 %v292
    %v910 = vunpack.c.h.b16 %v292
    %v911 = vunpack.c.l.b16 %v293
    %v912 = vunpack.c.h.b16 %v293
    %v913 = vunpack.c.l.b16 %v294
    %v914 = vunpack.c.h.b16 %v294
    %v915 = vunpack.c.l.b16 %v295
    %v916 = vunpack.c.h.b16 %v295
    %v917 = vunpack.c.l.b16 %v296
    %v918 = vunpack.c.h.b16 %v296
    %v919 = vunpack.c.l.b16 %v297
    %v920 = vunpack.c.h.b16 %v297
    %v921 = vunpack.c.l.b16 %v298
    %v922 = vunpack.c.h.b16 %v298
    %v923 = vunpack.c.l.b16 %v299
    %v924 = vunpack.c.h.b16 %v299
    %v925 = vunpack.c.l.b16 %v300
    %v926 = vunpack.c.h.b16 %v300
    %v927 = vunpack.c.l.b16 %v301
    %v928 = vunpack.c.h.b16 %v301
    %v929 = vunpack.c.l.b16 %v302
    %v930 = vunpack.c.h.b16 %v302
    %v931 = vunpack.c.l.b16 %v303
    %v932 = vunpack.c.h.b16 %v303
    %v933 = vunpack.c.l.b16 %v304
    %v934 = vunpack.c.h.b16 %v304
    %v935 = vunpack.c.l.b16 %v305
    %v936 = vunpack.c.h.b16 %v305
    %v937 = vunpack.c.l.b16 %v306
    %v938 = vunpack.c.h.b16 %v306
    %v939 = vunpack.c.l.b16 %v307
    %v940 = vunpack.c.h.b16 %v307
    %v941 = vunpack.c.l.b16 %v308
    %v942 = vunpack.c.h.b16 %v308
    %v943 = vunpack.c.l.b16 %v309
    %v944 = vunpack.c.h.b16 %v309
    %v945 = vunpack.c.l.b16 %v310
    %v946 = vunpack.c.h.b16 %v310
    %v947 = vunpack.c.l.b16 %v311
    %v948 = vunpack.c.h.b16 %v311
    %v949 = vunpack.c.l.b16 %v312
    %v950 = vunpack.c.h.b16 %v312
    %v951 = vunpack.c.l.b16 %v313
    %v952 = vunpack.c.h.b16 %v313
    %v953 = vunpack.c.l.b16 %v314
    %v954 = vunpack.c.h.b16 %v314
    %v955 = vunpack.c.l.b16 %v315
    %v956 = vunpack.c.h.b16 %v315
    %v957 = vunpack.c.l.b16 %v316
    %v958 = vunpack.c.h.b16 %v316
    %v959 = vunpack.c.l.b16 %v317
    %v960 = vunpack.c.h.b16 %v317
    %v961 = vunpack.c.l.b16 %v318
    %v962 = vunpack.c.h.b16 %v318
    %v963 = vunpack.c.l.b16 %v319
    %v964 = vunpack.c.h.b16 %v319
    %v965 = vunpack.c.l.b16 %v320
    %v966 = vunpack.c.h.b16 %v320
    %v967 = vunpack.c.l.b16 %v321
    %v968 = vunpack.c.h.b16 %v321
    %v969 = vunpack.c.l.b16 %v322
    %v970 = vunpack.c.h.b16 %v322
    %v971 = vunpack.c.l.b16 %v323
    %v972 = vunpack.c.h.b16 %v323
    %v973 = vunpack.c.l.b16 %v324
    %v974 = vunpack.c.h.b16 %v324
    %v975 = vunpack.c.l.b16 %v325
    %v976 = vunpack.c.h.b16 %v325
    %v977 = vunpack.c.l.b16 %v326
    %v978 = vunpack.c.h.b16 %v326
    %v979 = vunpack.c.l.b16 %v327
    %v980 = vunpack.c.h.b16 %v327
    %v981 = vunpack.c.l.b16 %v328
    %v982 = vunpack.c.h.b16 %v328
    %v983 = vunpack.c.l.b16 %v329
    %v984 = vunpack.c.h.b16 %v329
    %v985 = vunpack.c.l.b16 %v330
    %v986 = vunpack.c.h.b16 %v330
    %v987 = vunpack.c.l.b16 %v331
    %v988 = vunpack.c.h.b16 %v331
    %v989 = vunpack.c.l.b16 %v332
    %v990 = vunpack.c.h.b16 %v332
    %v991 = vunpack.c.l.b16 %v333
    %v992 = vunpack.c.h.b16 %v333
    %v993 = vunpack.c.l.b16 %v334
    %v994 = vunpack.c.h.b16 %v334
    %v995 = vunpack.c.l.b16 %v335
    %v996 = vunpack.c.h.b16 %v335
    %v997 = vunpack.c.l.b16 %v336
    %v998 = vunpack.c.h.b16 %v336
    %v999 = vunpack.c.l.b16 %v337
    %v1000 = vunpack.c.h.b16 %v337
    %v1001 = vunpack.c.l.b16 %v338
    %v1002 = vunpack.c.h.b16 %v338
    %v1003 = vunpack.c.l.b16 %v339
    %v1004 = vunpack.c.h.b16 %v339
    %v1005 = vunpack.c.l.b16 %v340
    %v1006 = vunpack.c.h.b16 %v340
    %v1007 = vunpack.c.l.b16 %v341
    %v1008 = vunpack.c.h.b16 %v341
    %v1009 = vunpack.c.l.b16 %v342
    %v1010 = vunpack.c.h.b16 %v342
    %v1011 = vunpack.c.l.b16 %v343
    %v1012 = vunpack.c.h.b16 %v343
    %v1013 = vunpack.c.l.b16 %v344
    %v1014 = vunpack.c.h.b16 %v344
    %v1015 = vunpack.c.l.b16 %v345
    %v1016 = vunpack.c.h.b16 %v345
    %v1017 = vunpack.c.l.b16 %v346
    %v1018 = vunpack.c.h.b16 %v346
    %v1019 = vunpack.c.l.b16 %v347
    %v1020 = vunpack.c.h.b16 %v347
    %v1021 = vunpack.c.l.b16 %v348
    %v1022 = vunpack.c.h.b16 %v348
    %v1023 = vunpack.c.l.b16 %v349
    %v1024 = vunpack.c.h.b16 %v349
    %v1025 = vunpack.c.l.b16 %v350
    %v1026 = vunpack.c.h.b16 %v350
    %v1027 = vunpack.c.l.b16 %v351
    %v1028 = vunpack.c.h.b16 %v351
    %v1029 = vunpack.c.l.b16 %v352
    %v1030 = vunpack.c.h.b16 %v352
    %v1031 = vunpack.c.l.b16 %v353
    %v1032 = vunpack.c.h.b16 %v353
    %v1033 = vunpack.c.l.b16 %v354
    %v1034 = vunpack.c.h.b16 %v354
    %v1035 = vunpack.c.l.b16 %v355
    %v1036 = vunpack.c.h.b16 %v355
    %v1037 = vunpack.c.l.b16 %v356
    %v1038 = vunpack.c.h.b16 %v356
    %v1039 = vunpack.c.l.b16 %v357
    %v1040 = vunpack.c.h.b16 %v357
    %v1041 = vunpack.c.l.b16 %v358
    %v1042 = vunpack.c.h.b16 %v358
    %v1043 = vunpack.c.l.b16 %v359
    %v1044 = vunpack.c.h.b16 %v359
    %v1045 = vunpack.c.l.b16 %v360
    %v1046 = vunpack.c.h.b16 %v360
    %v1047 = vunpack.c.l.b16 %v361
    %v1048 = vunpack.c.h.b16 %v361
    %v1049 = vunpack.c.l.b16 %v362
    %v1050 = vunpack.c.h.b16 %v362
    %v1051 = vunpack.c.l.b16 %v363
    %v1052 = vunpack.c.h.b16 %v363
    %v1053 = vunpack.c.l.b16 %v364
    %v1054 = vunpack.c.h.b16 %v364
    %v1055 = vunpack.c.l.b16 %v365
    %v1056 = vunpack.c.h.b16 %v365
    %v1057 = vunpack.c.l.b16 %v366
    %v1058 = vunpack.c.h.b16 %v366
    %v1059 = vunpack.c.l.b16 %v367
    %v1060 = vunpack.c.h.b16 %v367
    %v1061 = vunpack.c.l.b16 %v368
    %v1062 = vunpack.c.h.b16 %v368
    %v1063 = vunpack.c.l.b16 %v369
    %v1064 = vunpack.c.h.b16 %v369
    %v1065 = vunpack.c.l.b16 %v370
    %v1066 = vunpack.c.h.b16 %v370
    %v1067 = vunpack.c.l.b16 %v371
    %v1068 = vunpack.c.h.b16 %v371
    %v1069 = vunpack.c.l.b16 %v372
    %v1070 = vunpack.c.h.b16 %v372
    %v1071 = vunpack.c.l.b16 %v373
    %v1072 = vunpack.c.h.b16 %v373
    %v1073 = vunpack.c.l.b16 %v374
    %v1074 = vunpack.c.h.b16 %v374
    %v1075 = vunpack.c.l.b16 %v375
    %v1076 = vunpack.c.h.b16 %v375
    %v1077 = vunpack.c.l.b16 %v376
    %v1078 = vunpack.c.h.b16 %v376
    %v1079 = vunpack.c.l.b16 %v377
    %v1080 = vunpack.c.h.b16 %v377
    %v1081 = vunpack.c.l.b16 %v378
    %v1082 = vunpack.c.h.b16 %v378
    %v1083 = vunpack.c.l.b16 %v379
    %v1084 = vunpack.c.h.b16 %v379
    %v1085 = vunpack.c.l.b16 %v380
    %v1086 = vunpack.c.h.b16 %v380
    %v1087 = vunpack.c.l.b16 %v381
    %v1088 = vunpack.c.h.b16 %v381
    %v1089 = vunpack.c.l.b16 %v382
    %v1090 = vunpack.c.h.b16 %v382
    %v1091 = vunpack.c.l.b16 %v383
    %v1092 = vunpack.c.h.b16 %v383
    %v1093 = vunpack.c.l.b16 %v384
    %v1094 = vunpack.c.h.b16 %v384
    %v1095 = vunpack.c.l.b16 %v385
    %v1096 = vunpack.c.h.b16 %v385
    %v1097 = vunpack.c.l.b16 %v386
    %v1098 = vunpack.c.h.b16 %v386
    %v1099 = vunpack.c.l.b16 %v387
    %v1100 = vunpack.c.h.b16 %v387
    %v1101 = vunpack.c.l.b16 %v388
    %v1102 = vunpack.c.h.b16 %v388
    %v1103 = vunpack.c.l.b16 %v389
    %v1104 = vunpack.c.h.b16 %v389
    %v1105 = vunpack.c.l.b16 %v390
    %v1106 = vunpack.c.h.b16 %v390
    %v1107 = vunpack.c.l.b16 %v391
    %v1108 = vunpack.c.h.b16 %v391
    %v1109 = vunpack.c.l.b16 %v392
    %v1110 = vunpack.c.h.b16 %v392
    %v1111 = vunpack.c.l.b16 %v393
    %v1112 = vunpack.c.h.b16 %v393
    %v1113 = vunpack.c.l.b16 %v394
    %v1114 = vunpack.c.h.b16 %v394
    %v1115 = vunpack.c.l.b16 %v395
    %v1116 = vunpack.c.h.b16 %v395
    %v1117 = vunpack.c.l.b16 %v396
    %v1118 = vunpack.c.h.b16 %v396
    %v1119 = vunpack.c.l.b16 %v397
    %v1120 = vunpack.c.h.b16 %v397
    %v1121 = vunpack.c.l.b16 %v398
    %v1122 = vunpack.c.h.b16 %v398
    %v1123 = vunpack.c.l.b16 %v399
    %v1124 = vunpack.c.h.b16 %v399
    %v1125 = vunpack.c.l.b16 %v400
    %v1126 = vunpack.c.h.b16 %v400
    %v1127 = vunpack.c.l.b16 %v401
    %v1128 = vunpack.c.h.b16 %v401
    %v1129 = vunpack.c.l.b16 %v402
    %v1130 = vunpack.c.h.b16 %v402
    %v1131 = vunpack.c.l.b16 %v403
    %v1132 = vunpack.c.h.b16 %v403
    %v1133 = vunpack.c.l.b16 %v404
    %v1134 = vunpack.c.h.b16 %v404
    %v1135 = vunpack.c.l.b16 %v405
    %v1136 = vunpack.c.h.b16 %v405
    %v1137 = vunpack.c.l.b16 %v406
    %v1138 = vunpack.c.h.b16 %v406
    %v1139 = vunpack.c.l.b16 %v407
    %v1140 = vunpack.c.h.b16 %v407
    %v1141 = vunpack.c.l.b16 %v408
    %v1142 = vunpack.c.h.b16 %v408
    %v1143 = vunpack.c.l.b16 %v409
    %v1144 = vunpack.c.h.b16 %v409
    %v1145 = vunpack.c.l.b16 %v410
    %v1146 = vunpack.c.h.b16 %v410
    %v1147 = vunpack.c.l.b16 %v411
    %v1148 = vunpack.c.h.b16 %v411
    %v1149 = vunpack.c.l.b16 %v412
    %v1150 = vunpack.c.h.b16 %v412
    %v1151 = vunpack.c.l.b16 %v413
    %v1152 = vunpack.c.h.b16 %v413
    %v1153 = vunpack.c.l.b16 %v414
    %v1154 = vunpack.c.h.b16 %v414
    %v1155 = vunpack.c.l.b16 %v415
    %v1156 = vunpack.c.h.b16 %v415
    %v1157 = vunpack.c.l.b16 %v416
    %v1158 = vunpack.c.h.b16 %v416
    %v1159 = vunpack.c.l.b16 %v417
    %v1160 = vunpack.c.h.b16 %v417
    %v1161 = vunpack.c.l.b16 %v418
    %v1162 = vunpack.c.h.b16 %v418
    %v1163 = vunpack.c.l.b16 %v419
    %v1164 = vunpack.c.h.b16 %v419
    %v1165 = vunpack.c.l.b16 %v420
    %v1166 = vunpack.c.h.b16 %v420
    %v1167 = vunpack.c.l.b16 %v421
    %v1168 = vunpack.c.h.b16 %v421
    %v1169 = vunpack.c.l.b16 %v422
    %v1170 = vunpack.c.h.b16 %v422
    %v1171 = vunpack.c.l.b16 %v423
    %v1172 = vunpack.c.h.b16 %v423
    %v1173 = vunpack.c.l.b16 %v424
    %v1174 = vunpack.c.h.b16 %v424
    %v1175 = vunpack.c.l.b16 %v425
    %v1176 = vunpack.c.h.b16 %v425
    %v1177 = vunpack.c.l.b16 %v426
    %v1178 = vunpack.c.h.b16 %v426
    %v1179 = vunpack.c.l.b16 %v427
    %v1180 = vunpack.c.h.b16 %v427
    %v1181 = vunpack.c.l.b16 %v428
    %v1182 = vunpack.c.h.b16 %v428
    %v1183 = vunpack.c.l.b16 %v429
    %v1184 = vunpack.c.h.b16 %v429
    %v1185 = vunpack.c.l.b16 %v430
    %v1186 = vunpack.c.h.b16 %v430
    %v1187 = vunpack.c.l.b16 %v431
    %v1188 = vunpack.c.h.b16 %v431
    %v1189 = vunpack.c.l.b16 %v432
    %v1190 = vunpack.c.h.b16 %v432
    %v1191 = vunpack.c.l.b16 %v433
    %v1192 = vunpack.c.h.b16 %v433
    %v1193 = vunpack.c.l.b16 %v434
    %v1194 = vunpack.c.h.b16 %v434
    %v1195 = vunpack.c.l.b16 %v435
    %v1196 = vunpack.c.h.b16 %v435
    %v1197 = vunpack.c.l.b16 %v436
    %v1198 = vunpack.c.h.b16 %v436
    %v1199 = vunpack.c.l.b16 %v437
    %v1200 = vunpack.c.h.b16 %v437
    %v1201 = vunpack.c.l.b16 %v438
    %v1202 = vunpack.c.h.b16 %v438
    %v1203 = vunpack.c.l.b16 %v439
    %v1204 = vunpack.c.h.b16 %v439
    %v1205 = vunpack.c.l.b16 %v440
    %v1206 = vunpack.c.h.b16 %v440
    %v1207 = vunpack.c.l.b16 %v441
    %v1208 = vunpack.c.h.b16 %v441
    %v1209 = vunpack.c.l.b16 %v442
    %v1210 = vunpack.c.h.b16 %v442
    %v1211 = vunpack.c.l.b16 %v443
    %v1212 = vunpack.c.h.b16 %v443
    %v1213 = vunpack.c.l.b16 %v444
    %v1214 = vunpack.c.h.b16 %v444
    %v1215 = vunpack.c.l.b16 %v445
    %v1216 = vunpack.c.h.b16 %v445
    %v1217 = vunpack.c.l.b16 %v446
    %v1218 = vunpack.c.h.b16 %v446
    %v1219 = vpack.c.b16 %v711, %v707
    %v1220 = vpack.c.b16 %v712, %v708
    %v1221 = vpack.c.b16 %v713, %v709
    %v1222 = vpack.c.b16 %v714, %v710
    %v1223 = vpack.c.b16 %v719, %v715
    %v1224 = vpack.c.b16 %v720, %v716
    %v1225 = vpack.c.b16 %v721, %v717
    %v1226 = vpack.c.b16 %v722, %v718
    %v1227 = vpack.c.b16 %v727, %v723
    %v1228 = vpack.c.b16 %v728, %v724
    %v1229 = vpack.c.b16 %v729, %v725
    %v1230 = vpack.c.b16 %v730, %v726
    %v1231 = vpack.c.b16 %v735, %v731
    %v1232 = vpack.c.b16 %v736, %v732
    %v1233 = vpack.c.b16 %v737, %v733
    %v1234 = vpack.c.b16 %v738, %v734
    %v1235 = vpack.c.b16 %v743, %v739
    %v1236 = vpack.c.b16 %v744, %v740
    %v1237 = vpack.c.b16 %v745, %v741
    %v1238 = vpack.c.b16 %v746, %v742
    %v1239 = vpack.c.b16 %v751, %v747
    %v1240 = vpack.c.b16 %v752, %v748
    %v1241 = vpack.c.b16 %v753, %v749
    %v1242 = vpack.c.b16 %v754, %v750
    %v1243 = vpack.c.b16 %v759, %v755
    %v1244 = vpack.c.b16 %v760, %v756
    %v1245 = vpack.c.b16 %v761, %v757
    %v1246 = vpack.c.b16 %v762, %v758
    %v1247 = vpack.c.b16 %v767, %v763
    %v1248 = vpack.c.b16 %v768, %v764
    %v1249 = vpack.c.b16 %v769, %v765
    %v1250 = vpack.c.b16 %v770, %v766
    %v1251 = vpack.c.b16 %v775, %v771
    %v1252 = vpack.c.b16 %v776, %v772
    %v1253 = vpack.c.b16 %v777, %v773
    %v1254 = vpack.c.b16 %v778, %v774
    %v1255 = vpack.c.b16 %v783, %v779
    %v1256 = vpack.c.b16 %v784, %v780
    %v1257 = vpack.c.b16 %v785, %v781
    %v1258 = vpack.c.b16 %v786, %v782
    %v1259 = vpack.c.b16 %v791, %v787
    %v1260 = vpack.c.b16 %v792, %v788
    %v1261 = vpack.c.b16 %v793, %v789
    %v1262 = vpack.c.b16 %v794, %v790
    %v1263 = vpack.c.b16 %v799, %v795
    %v1264 = vpack.c.b16 %v800, %v796
    %v1265 = vpack.c.b16 %v801, %v797
    %v1266 = vpack.c.b16 %v802, %v798
    %v1267 = vpack.c.b16 %v807, %v803
    %v1268 = vpack.c.b16 %v808, %v804
    %v1269 = vpack.c.b16 %v809, %v805
    %v1270 = vpack.c.b16 %v810, %v806
    %v1271 = vpack.c.b16 %v815, %v811
    %v1272 = vpack.c.b16 %v816, %v812
    %v1273 = vpack.c.b16 %v817, %v813
    %v1274 = vpack.c.b16 %v818, %v814
    %v1275 = vpack.c.b16 %v823, %v819
    %v1276 = vpack.c.b16 %v824, %v820
    %v1277 = vpack.c.b16 %v825, %v821
    %v1278 = vpack.c.b16 %v826, %v822
    %v1279 = vpack.c.b16 %v831, %v827
    %v1280 = vpack.c.b16 %v832, %v828
    %v1281 = vpack.c.b16 %v833, %v829
    %v1282 = vpack.c.b16 %v834, %v830
    %v1283 = vpack.c.b16 %v839, %v835
    %v1284 = vpack.c.b16 %v840, %v836
    %v1285 = vpack.c.b16 %v841, %v837
    %v1286 = vpack.c.b16 %v842, %v838
    %v1287 = vpack.c.b16 %v847, %v843
    %v1288 = vpack.c.b16 %v848, %v844
    %v1289 = vpack.c.b16 %v849, %v845
    %v1290 = vpack.c.b16 %v850, %v846
    %v1291 = vpack.c.b16 %v855, %v851
    %v1292 = vpack.c.b16 %v856, %v852
    %v1293 = vpack.c.b16 %v857, %v853
    %v1294 = vpack.c.b16 %v858, %v854
    %v1295 = vpack.c.b16 %v863, %v859
    %v1296 = vpack.c.b16 %v864, %v860
    %v1297 = vpack.c.b16 %v865, %v861
    %v1298 = vpack.c.b16 %v866, %v862
    %v1299 = vpack.c.b16 %v871, %v867
    %v1300 = vpack.c.b16 %v872, %v868
    %v1301 = vpack.c.b16 %v873, %v869
    %v1302 = vpack.c.b16 %v874, %v870
    %v1303 = vpack.c.b16 %v879, %v875
    %v1304 = vpack.c.b16 %v880, %v876
    %v1305 = vpack.c.b16 %v881, %v877
    %v1306 = vpack.c.b16 %v882, %v878
    %v1307 = vpack.c.b16 %v887, %v883
    %v1308 = vpack.c.b16 %v888, %v884
    %v1309 = vpack.c.b16 %v889, %v885
    %v1310 = vpack.c.b16 %v890, %v886
    %v1311 = vpack.c.b16 %v895, %v891
    %v1312 = vpack.c.b16 %v896, %v892
    %v1313 = vpack.c.b16 %v897, %v893
    %v1314 = vpack.c.b16 %v898, %v894
    %v1315 = vpack.c.b16 %v903, %v899
    %v1316 = vpack.c.b16 %v904, %v900
    %v1317 = vpack.c.b16 %v905, %v901
    %v1318 = vpack.c.b16 %v906, %v902
    %v1319 = vpack.c.b16 %v911, %v907
    %v1320 = vpack.c.b16 %v912, %v908
    %v1321 = vpack.c.b16 %v913, %v909
    %v1322 = vpack.c.b16 %v914, %v910
    %v1323 = vpack.c.b16 %v919, %v915
    %v1324 = vpack.c.b16 %v920, %v916
    %v1325 = vpack.c.b16 %v921, %v917
    %v1326 = vpack.c.b16 %v922, %v918
    %v1327 = vpack.c.b16 %v927, %v923
    %v1328 = vpack.c.b16 %v928, %v924
    %v1329 = vpack.c.b16 %v929, %v925
    %v1330 = vpack.c.b16 %v930, %v926
    %v1331 = vpack.c.b16 %v935, %v931
    %v1332 = vpack.c.b16 %v936, %v932
    %v1333 = vpack.c.b16 %v937, %v933
    %v1334 = vpack.c.b16 %v938, %v934
    %v1335 = vpack.c.b16 %v943, %v939
    %v1336 = vpack.c.b16 %v944, %v940
    %v1337 = vpack.c.b16 %v945, %v941
    %v1338 = vpack.c.b16 %v946, %v942
    %v1339 = vpack.c.b16 %v951, %v947
    %v1340 = vpack.c.b16 %v952, %v948
    %v1341 = vpack.c.b16 %v953, %v949
    %v1342 = vpack.c.b16 %v954, %v950
    %v1343 = vpack.c.b16 %v959, %v955
    %v1344 = vpack.c.b16 %v960, %v956
    %v1345 = vpack.c.b16 %v961, %v957
    %v1346 = vpack.c.b16 %v962, %v958
    %v1347 = vpack.c.b16 %v967, %v963
    %v1348 = vpack.c.b16 %v968, %v964
    %v1349 = vpack.c.b16 %v969, %v965
    %v1350 = vpack.c.b16 %v970, %v966
    %v1351 = vpack.c.b16 %v975, %v971
    %v1352 = vpack.c.b16 %v976, %v972
    %v1353 = vpack.c.b16 %v977, %v973
    %v1354 = vpack.c.b16 %v978, %v974
    %v1355 = vpack.c.b16 %v983, %v979
    %v1356 = vpack.c.b16 %v984, %v980
    %v1357 = vpack.c.b16 %v985, %v981
    %v1358 = vpack.c.b16 %v986, %v982
    %v1359 = vpack.c.b16 %v991, %v987
    %v1360 = vpack.c.b16 %v992, %v988
    %v1361 = vpack.c.b16 %v993, %v989
    %v1362 = vpack.c.b16 %v994, %v990
    %v1363 = vpack.c.b16 %v999, %v995
    %v1364 = vpack.c.b16 %v1000, %v996
    %v1365 = vpack.c.b16 %v1001, %v997
    %v1366 = vpack.c.b16 %v1002, %v998
    %v1367 = vpack.c.b16 %v1007, %v1003
    %v1368 = vpack.c.b16 %v1008, %v1004
    %v1369 = vpack.c.b16 %v1009, %v1005
    %v1370 = vpack.c.b16 %v1010, %v1006
    %v1371 = vpack.c.b16 %v1015, %v1011
    %v1372 = vpack.c.b16 %v1016, %v1012
    %v1373 = vpack.c.b16 %v1017, %v1013
    %v1374 = vpack.c.b16 %v1018, %v1014
    %v1375 = vpack.c.b16 %v1023, %v1019
    %v1376 = vpack.c.b16 %v1024, %v1020
    %v1377 = vpack.c.b16 %v1025, %v1021
    %v1378 = vpack.c.b16 %v1026, %v1022
    %v1379 = vpack.c.b16 %v1031, %v1027
    %v1380 = vpack.c.b16 %v1032, %v1028
    %v1381 = vpack.c.b16 %v1033, %v1029
    %v1382 = vpack.c.b16 %v1034, %v1030
    %v1383 = vpack.c.b16 %v1039, %v1035
    %v1384 = vpack.c.b16 %v1040, %v1036
    %v1385 = vpack.c.b16 %v1041, %v1037
    %v1386 = vpack.c.b16 %v1042, %v1038
    %v1387 = vpack.c.b16 %v1047, %v1043
    %v1388 = vpack.c.b16 %v1048, %v1044
    %v1389 = vpack.c.b16 %v1049, %v1045
    %v1390 = vpack.c.b16 %v1050, %v1046
    %v1391 = vpack.c.b16 %v1055, %v1051
    %v1392 = vpack.c.b16 %v1056, %v1052
    %v1393 = vpack.c.b16 %v1057, %v1053
    %v1394 = vpack.c.b16 %v1058, %v1054
    %v1395 = vpack.c.b16 %v1063, %v1059
    %v1396 = vpack.c.b16 %v1064, %v1060
    %v1397 = vpack.c.b16 %v1065, %v1061
    %v1398 = vpack.c.b16 %v1066, %v1062
    %v1399 = vpack.c.b16 %v1071, %v1067
    %v1400 = vpack.c.b16 %v1072, %v1068
    %v1401 = vpack.c.b16 %v1073, %v1069
    %v1402 = vpack.c.b16 %v1074, %v1070
    %v1403 = vpack.c.b16 %v1079, %v1075
    %v1404 = vpack.c.b16 %v1080, %v1076
    %v1405 = vpack.c.b16 %v1081, %v1077
    %v1406 = vpack.c.b16 %v1082, %v1078
    %v1407 = vpack.c.b16 %v1087, %v1083
    %v1408 = vpack.c.b16 %v1088, %v1084
    %v1409 = vpack.c.b16 %v1089, %v1085
    %v1410 = vpack.c.b16 %v1090, %v1086
    %v1411 = vpack.c.b16 %v1095, %v1091
    %v1412 = vpack.c.b16 %v1096, %v1092
    %v1413 = vpack.c.b16 %v1097, %v1093
    %v1414 = vpack.c.b16 %v1098, %v1094
    %v1415 = vpack.c.b16 %v1103, %v1099
    %v1416 = vpack.c.b16 %v1104, %v1100
    %v1417 = vpack.c.b16 %v1105, %v1101
    %v1418 = vpack.c.b16 %v1106, %v1102
    %v1419 = vpack.c.b16 %v1111, %v1107
    %v1420 = vpack.c.b16 %v1112, %v1108
    %v1421 = vpack.c.b16 %v1113, %v1109
    %v1422 = vpack.c.b16 %v1114, %v1110
    %v1423 = vpack.c.b16 %v1119, %v1115
    %v1424 = vpack.c.b16 %v1120, %v1116
    %v1425 = vpack.c.b16 %v1121, %v1117
    %v1426 = vpack.c.b16 %v1122, %v1118
    %v1427 = vpack.c.b16 %v1127, %v1123
    %v1428 = vpack.c.b16 %v1128, %v1124
    %v1429 = vpack.c.b16 %v1129, %v1125
    %v1430 = vpack.c.b16 %v1130, %v1126
    %v1431 = vpack.c.b16 %v1135, %v1131
    %v1432 = vpack.c.b16 %v1136, %v1132
    %v1433 = vpack.c.b16 %v1137, %v1133
    %v1434 = vpack.c.b16 %v1138, %v1134
    %v1435 = vpack.c.b16 %v1143, %v1139
    %v1436 = vpack.c.b16 %v1144, %v1140
    %v1437 = vpack.c.b16 %v1145, %v1141
    %v1438 = vpack.c.b16 %v1146, %v1142
    %v1439 = vpack.c.b16 %v1151, %v1147
    %v1440 = vpack.c.b16 %v1152, %v1148
    %v1441 = vpack.c.b16 %v1153, %v1149
    %v1442 = vpack.c.b16 %v1154, %v1150
    %v1443 = vpack.c.b16 %v1159, %v1155
    %v1444 = vpack.c.b16 %v1160, %v1156
    %v1445 = vpack.c.b16 %v1161, %v1157
    %v1446 = vpack.c.b16 %v1162, %v1158
    %v1447 = vpack.c.b16 %v1167, %v1163
    %v1448 = vpack.c.b16 %v1168, %v1164
    %v1449 = vpack.c.b16 %v1169, %v1165
    %v1450 = vpack.c.b16 %v1170, %v1166
    %v1451 = vpack.c.b16 %v1175, %v1171
    %v1452 = vpack.c.b16 %v1176, %v1172
    %v1453 = vpack.c.b16 %v1177, %v1173
    %v1454 = vpack.c.b16 %v1178, %v1174
    %v1455 = vpack.c.b16 %v1183, %v1179
    %v1456 = vpack.c.b16 %v1184, %v1180
    %v1457 = vpack.c.b16 %v1185, %v1181
    %v1458 = vpack.c.b16 %v1186, %v1182
    %v1459 = vpack.c.b16 %v1191, %v1187
    %v1460 = vpack.c.b16 %v1192, %v1188
    %v1461 = vpack.c.b16 %v1193, %v1189
    %v1462 = vpack.c.b16 %v1194, %v1190
    %v1463 = vpack.c.b16 %v1199, %v1195
    %v1464 = vpack.c.b16 %v1200, %v1196
    %v1465 = vpack.c.b16 %v1201, %v1197
    %v1466 = vpack.c.b16 %v1202, %v1198
    %v1467 = vpack.c.b16 %v1207, %v1203
    %v1468 = vpack.c.b16 %v1208, %v1204
    %v1469 = vpack.c.b16 %v1209, %v1205
    %v1470 = vpack.c.b16 %v1210, %v1206
    %v1471 = vpack.c.b16 %v1215, %v1211
    %v1472 = vpack.c.b16 %v1216, %v1212
    %v1473 = vpack.c.b16 %v1217, %v1213
    %v1474 = vpack.c.b16 %v1218, %v1214
    %1731 = vmatpush.bf16.msra.mxu0 %v1247
    %1732 = vmatpush.bf16.msra.mxu0 %v1243
    %1733 = vmatpush.bf16.msra.mxu0 %v1239
    %1734 = vmatpush.bf16.msra.mxu0 %v1235
    %1735 = vmatpush.bf16.msra.mxu0 %v1231
    %1736 = vmatpush.bf16.msra.mxu0 %v1227
    %1737 = vmatpush.bf16.msra.mxu0 %v1223
    %1738 = vmatpush.bf16.msra.mxu0 %v1219
    %1739 = vmatmul.bf16.gmra.mxu0 %v183
    %v1740 = vpop.f32.mrf.mxu0
    %v1741 = vadd.f32 %v447, %v1740
    %v1742 = vpop.f32.mrf.mxu0
    %1743 = vdwg.mxu0
    %1744 = vmatpush.bf16.msra.mxu0 %v1279
    %1745 = vmatpush.bf16.msra.mxu0 %v1275
    %1746 = vmatpush.bf16.msra.mxu0 %v1271
    %1747 = vmatpush.bf16.msra.mxu0 %v1267
    %1748 = vmatpush.bf16.msra.mxu0 %v1263
    %1749 = vmatpush.bf16.msra.mxu0 %v1259
    %1750 = vmatpush.bf16.msra.mxu0 %v1255
    %1751 = vmatpush.bf16.msra.mxu0 %v1251
    %1752 = vmatmul.bf16.gmra.mxu0 %v184
    %v1753 = vpop.f32.mrf.mxu0
    %v1754 = vadd.f32 %v1741, %v1753
    %v1755 = vpop.f32.mrf.mxu0
    %1756 = vdwg.mxu0
    %1757 = vmatpush.bf16.msra.mxu0 %v1311
    %1758 = vmatpush.bf16.msra.mxu0 %v1307
    %1759 = vmatpush.bf16.msra.mxu0 %v1303
    %1760 = vmatpush.bf16.msra.mxu0 %v1299
    %1761 = vmatpush.bf16.msra.mxu0 %v1295
    %1762 = vmatpush.bf16.msra.mxu0 %v1291
    %1763 = vmatpush.bf16.msra.mxu0 %v1287
    %1764 = vmatpush.bf16.msra.mxu0 %v1283
    %1765 = vmatmul.bf16.gmra.mxu0 %v185
    %v1766 = vpop.f32.mrf.mxu0
    %v1767 = vadd.f32 %v1754, %v1766
    %v1768 = vpop.f32.mrf.mxu0
    %1769 = vdwg.mxu0
    %1770 = vmatpush.bf16.msra.mxu0 %v1343
    %1771 = vmatpush.bf16.msra.mxu0 %v1339
    %1772 = vmatpush.bf16.msra.mxu0 %v1335
    %1773 = vmatpush.bf16.msra.mxu0 %v1331
    %1774 = vmatpush.bf16.msra.mxu0 %v1327
    %1775 = vmatpush.bf16.msra.mxu0 %v1323
    %1776 = vmatpush.bf16.msra.mxu0 %v1319
    %1777 = vmatpush.bf16.msra.mxu0 %v1315
    %1778 = vmatmul.bf16.gmra.mxu0 %v186
    %v1779 = vpop.f32.mrf.mxu0
    %v1780 = vadd.f32 %v1767, %v1779
    %v1781 = vpop.f32.mrf.mxu0
    %1782 = vdwg.mxu0
    %1783 = vmatpush.bf16.msra.mxu0 %v1375
    %1784 = vmatpush.bf16.msra.mxu0 %v1371
    %1785 = vmatpush.bf16.msra.mxu0 %v1367
    %1786 = vmatpush.bf16.msra.mxu0 %v1363
    %1787 = vmatpush.bf16.msra.mxu0 %v1359
    %1788 = vmatpush.bf16.msra.mxu0 %v1355
    %1789 = vmatpush.bf16.msra.mxu0 %v1351
    %1790 = vmatpush.bf16.msra.mxu0 %v1347
    %1791 = vmatmul.bf16.gmra.mxu0 %v187
    %v1792 = vpop.f32.mrf.mxu0
    %v1793 = vadd.f32 %v1780, %v1792
    %v1794 = vpop.f32.mrf.mxu0
    %1795 = vdwg.mxu0
    %1796 = vmatpush.bf16.msra.mxu0 %v1407
    %1797 = vmatpush.bf16.msra.mxu0 %v1403
    %1798 = vmatpush.bf16.msra.mxu0 %v1399
    %1799 = vmatpush.bf16.msra.mxu0 %v1395
    %1800 = vmatpush.bf16.msra.mxu0 %v1391
    %1801 = vmatpush.bf16.msra.mxu0 %v1387
    %1802 = vmatpush.bf16.msra.mxu0 %v1383
    %1803 = vmatpush.bf16.msra.mxu0 %v1379
    %1804 = vmatmul.bf16.gmra.mxu0 %v188
    %v1805 = vpop.f32.mrf.mxu0
    %v1806 = vadd.f32 %v1793, %v1805
    %v1807 = vpop.f32.mrf.mxu0
    %1808 = vdwg.mxu0
    %1809 = vmatpush.bf16.msra.mxu0 %v1439
    %1810 = vmatpush.bf16.msra.mxu0 %v1435
    %1811 = vmatpush.bf16.msra.mxu0 %v1431
    %1812 = vmatpush.bf16.msra.mxu0 %v1427
    %1813 = vmatpush.bf16.msra.mxu0 %v1423
    %1814 = vmatpush.bf16.msra.mxu0 %v1419
    %1815 = vmatpush.bf16.msra.mxu0 %v1415
    %1816 = vmatpush.bf16.msra.mxu0 %v1411
    %1817 = vmatmul.bf16.gmra.mxu0 %v189
    %v1818 = vpop.f32.mrf.mxu0
    %v1819 = vadd.f32 %v1806, %v1818
    %v1820 = vpop.f32.mrf.mxu0
    %1821 = vdwg.mxu0
    %1822 = vmatpush.bf16.msra.mxu0 %v1471
    %1823 = vmatpush.bf16.msra.mxu0 %v1467
    %1824 = vmatpush.bf16.msra.mxu0 %v1463
    %1825 = vmatpush.bf16.msra.mxu0 %v1459
    %1826 = vmatpush.bf16.msra.mxu0 %v1455
    %1827 = vmatpush.bf16.msra.mxu0 %v1451
    %1828 = vmatpush.bf16.msra.mxu0 %v1447
    %1829 = vmatpush.bf16.msra.mxu0 %v1443
    %1830 = vmatmul.bf16.gmra.mxu0 %v190
    %v1831 = vpop.f32.mrf.mxu0
    %v1832 = vadd.f32 %v1819, %v1831
    %v1833 = vpop.f32.mrf.mxu0
    %1834 = vdwg.mxu0
    %1835 = vmatpush.bf16.msra.mxu0 %v1248
    %1836 = vmatpush.bf16.msra.mxu0 %v1244
    %1837 = vmatpush.bf16.msra.mxu0 %v1240
    %1838 = vmatpush.bf16.msra.mxu0 %v1236
    %1839 = vmatpush.bf16.msra.mxu0 %v1232
    %1840 = vmatpush.bf16.msra.mxu0 %v1228
    %1841 = vmatpush.bf16.msra.mxu0 %v1224
    %1842 = vmatpush.bf16.msra.mxu0 %v1220
    %1843 = vmatmul.bf16.gmra.mxu0 %v183
    %v1844 = vpop.f32.mrf.mxu0
    %v1845 = vadd.f32 %v448, %v1844
    %v1846 = vpop.f32.mrf.mxu0
    %1847 = vdwg.mxu0
    %1848 = vmatpush.bf16.msra.mxu0 %v1280
    %1849 = vmatpush.bf16.msra.mxu0 %v1276
    %1850 = vmatpush.bf16.msra.mxu0 %v1272
    %1851 = vmatpush.bf16.msra.mxu0 %v1268
    %1852 = vmatpush.bf16.msra.mxu0 %v1264
    %1853 = vmatpush.bf16.msra.mxu0 %v1260
    %1854 = vmatpush.bf16.msra.mxu0 %v1256
    %1855 = vmatpush.bf16.msra.mxu0 %v1252
    %1856 = vmatmul.bf16.gmra.mxu0 %v184
    %v1857 = vpop.f32.mrf.mxu0
    %v1858 = vadd.f32 %v1845, %v1857
    %v1859 = vpop.f32.mrf.mxu0
    %1860 = vdwg.mxu0
    %1861 = vmatpush.bf16.msra.mxu0 %v1312
    %1862 = vmatpush.bf16.msra.mxu0 %v1308
    %1863 = vmatpush.bf16.msra.mxu0 %v1304
    %1864 = vmatpush.bf16.msra.mxu0 %v1300
    %1865 = vmatpush.bf16.msra.mxu0 %v1296
    %1866 = vmatpush.bf16.msra.mxu0 %v1292
    %1867 = vmatpush.bf16.msra.mxu0 %v1288
    %1868 = vmatpush.bf16.msra.mxu0 %v1284
    %1869 = vmatmul.bf16.gmra.mxu0 %v185
    %v1870 = vpop.f32.mrf.mxu0
    %v1871 = vadd.f32 %v1858, %v1870
    %v1872 = vpop.f32.mrf.mxu0
    %1873 = vdwg.mxu0
    %1874 = vmatpush.bf16.msra.mxu0 %v1344
    %1875 = vmatpush.bf16.msra.mxu0 %v1340
    %1876 = vmatpush.bf16.msra.mxu0 %v1336
    %1877 = vmatpush.bf16.msra.mxu0 %v1332
    %1878 = vmatpush.bf16.msra.mxu0 %v1328
    %1879 = vmatpush.bf16.msra.mxu0 %v1324
    %1880 = vmatpush.bf16.msra.mxu0 %v1320
    %1881 = vmatpush.bf16.msra.mxu0 %v1316
    %1882 = vmatmul.bf16.gmra.mxu0 %v186
    %v1883 = vpop.f32.mrf.mxu0
    %v1884 = vadd.f32 %v1871, %v1883
    %v1885 = vpop.f32.mrf.mxu0
    %1886 = vdwg.mxu0
    %1887 = vmatpush.bf16.msra.mxu0 %v1376
    %1888 = vmatpush.bf16.msra.mxu0 %v1372
    %1889 = vmatpush.bf16.msra.mxu0 %v1368
    %1890 = vmatpush.bf16.msra.mxu0 %v1364
    %1891 = vmatpush.bf16.msra.mxu0 %v1360
    %1892 = vmatpush.bf16.msra.mxu0 %v1356
    %1893 = vmatpush.bf16.msra.mxu0 %v1352
    %1894 = vmatpush.bf16.msra.mxu0 %v1348
    %1895 = vmatmul.bf16.gmra.mxu0 %v187
    %v1896 = vpop.f32.mrf.mxu0
    %v1897 = vadd.f32 %v1884, %v1896
    %v1898 = vpop.f32.mrf.mxu0
    %1899 = vdwg.mxu0
    %1900 = vmatpush.bf16.msra.mxu0 %v1408
    %1901 = vmatpush.bf16.msra.mxu0 %v1404
    %1902 = vmatpush.bf16.msra.mxu0 %v1400
    %1903 = vmatpush.bf16.msra.mxu0 %v1396
    %1904 = vmatpush.bf16.msra.mxu0 %v1392
    %1905 = vmatpush.bf16.msra.mxu0 %v1388
    %1906 = vmatpush.bf16.msra.mxu0 %v1384
    %1907 = vmatpush.bf16.msra.mxu0 %v1380
    %1908 = vmatmul.bf16.gmra.mxu0 %v188
    %v1909 = vpop.f32.mrf.mxu0
    %v1910 = vadd.f32 %v1897, %v1909
    %v1911 = vpop.f32.mrf.mxu0
    %1912 = vdwg.mxu0
    %1913 = vmatpush.bf16.msra.mxu0 %v1440
    %1914 = vmatpush.bf16.msra.mxu0 %v1436
    %1915 = vmatpush.bf16.msra.mxu0 %v1432
    %1916 = vmatpush.bf16.msra.mxu0 %v1428
    %1917 = vmatpush.bf16.msra.mxu0 %v1424
    %1918 = vmatpush.bf16.msra.mxu0 %v1420
    %1919 = vmatpush.bf16.msra.mxu0 %v1416
    %1920 = vmatpush.bf16.msra.mxu0 %v1412
    %1921 = vmatmul.bf16.gmra.mxu0 %v189
    %v1922 = vpop.f32.mrf.mxu0
    %v1923 = vadd.f32 %v1910, %v1922
    %v1924 = vpop.f32.mrf.mxu0
    %1925 = vdwg.mxu0
    %1926 = vmatpush.bf16.msra.mxu0 %v1472
    %1927 = vmatpush.bf16.msra.mxu0 %v1468
    %1928 = vmatpush.bf16.msra.mxu0 %v1464
    %1929 = vmatpush.bf16.msra.mxu0 %v1460
    %1930 = vmatpush.bf16.msra.mxu0 %v1456
    %1931 = vmatpush.bf16.msra.mxu0 %v1452
    %1932 = vmatpush.bf16.msra.mxu0 %v1448
    %1933 = vmatpush.bf16.msra.mxu0 %v1444
    %1934 = vmatmul.bf16.gmra.mxu0 %v190
    %v1935 = vpop.f32.mrf.mxu0
    %v1936 = vadd.f32 %v1923, %v1935
    %v1937 = vpop.f32.mrf.mxu0
    %1938 = vdwg.mxu0
    %1939 = vmatpush.bf16.msra.mxu0 %v1249
    %1940 = vmatpush.bf16.msra.mxu0 %v1245
    %1941 = vmatpush.bf16.msra.mxu0 %v1241
    %1942 = vmatpush.bf16.msra.mxu0 %v1237
    %1943 = vmatpush.bf16.msra.mxu0 %v1233
    %1944 = vmatpush.bf16.msra.mxu0 %v1229
    %1945 = vmatpush.bf16.msra.mxu0 %v1225
    %1946 = vmatpush.bf16.msra.mxu0 %v1221
    %1947 = vmatmul.bf16.gmra.mxu0 %v183
    %v1948 = vpop.f32.mrf.mxu0
    %v1949 = vadd.f32 %v449, %v1948
    %v1950 = vpop.f32.mrf.mxu0
    %1951 = vdwg.mxu0
    %1952 = vmatpush.bf16.msra.mxu0 %v1281
    %1953 = vmatpush.bf16.msra.mxu0 %v1277
    %1954 = vmatpush.bf16.msra.mxu0 %v1273
    %1955 = vmatpush.bf16.msra.mxu0 %v1269
    %1956 = vmatpush.bf16.msra.mxu0 %v1265
    %1957 = vmatpush.bf16.msra.mxu0 %v1261
    %1958 = vmatpush.bf16.msra.mxu0 %v1257
    %1959 = vmatpush.bf16.msra.mxu0 %v1253
    %1960 = vmatmul.bf16.gmra.mxu0 %v184
    %v1961 = vpop.f32.mrf.mxu0
    %v1962 = vadd.f32 %v1949, %v1961
    %v1963 = vpop.f32.mrf.mxu0
    %1964 = vdwg.mxu0
    %1965 = vmatpush.bf16.msra.mxu0 %v1313
    %1966 = vmatpush.bf16.msra.mxu0 %v1309
    %1967 = vmatpush.bf16.msra.mxu0 %v1305
    %1968 = vmatpush.bf16.msra.mxu0 %v1301
    %1969 = vmatpush.bf16.msra.mxu0 %v1297
    %1970 = vmatpush.bf16.msra.mxu0 %v1293
    %1971 = vmatpush.bf16.msra.mxu0 %v1289
    %1972 = vmatpush.bf16.msra.mxu0 %v1285
    %1973 = vmatmul.bf16.gmra.mxu0 %v185
    %v1974 = vpop.f32.mrf.mxu0
    %v1975 = vadd.f32 %v1962, %v1974
    %v1976 = vpop.f32.mrf.mxu0
    %1977 = vdwg.mxu0
    %1978 = vmatpush.bf16.msra.mxu0 %v1345
    %1979 = vmatpush.bf16.msra.mxu0 %v1341
    %1980 = vmatpush.bf16.msra.mxu0 %v1337
    %1981 = vmatpush.bf16.msra.mxu0 %v1333
    %1982 = vmatpush.bf16.msra.mxu0 %v1329
    %1983 = vmatpush.bf16.msra.mxu0 %v1325
    %1984 = vmatpush.bf16.msra.mxu0 %v1321
    %1985 = vmatpush.bf16.msra.mxu0 %v1317
    %1986 = vmatmul.bf16.gmra.mxu0 %v186
    %v1987 = vpop.f32.mrf.mxu0
    %v1988 = vadd.f32 %v1975, %v1987
    %v1989 = vpop.f32.mrf.mxu0
    %1990 = vdwg.mxu0
    %1991 = vmatpush.bf16.msra.mxu0 %v1377
    %1992 = vmatpush.bf16.msra.mxu0 %v1373
    %1993 = vmatpush.bf16.msra.mxu0 %v1369
    %1994 = vmatpush.bf16.msra.mxu0 %v1365
    %1995 = vmatpush.bf16.msra.mxu0 %v1361
    %1996 = vmatpush.bf16.msra.mxu0 %v1357
    %1997 = vmatpush.bf16.msra.mxu0 %v1353
    %1998 = vmatpush.bf16.msra.mxu0 %v1349
    %1999 = vmatmul.bf16.gmra.mxu0 %v187
    %v2000 = vpop.f32.mrf.mxu0
    %v2001 = vadd.f32 %v1988, %v2000
    %v2002 = vpop.f32.mrf.mxu0
    %2003 = vdwg.mxu0
    %2004 = vmatpush.bf16.msra.mxu0 %v1409
    %2005 = vmatpush.bf16.msra.mxu0 %v1405
    %2006 = vmatpush.bf16.msra.mxu0 %v1401
    %2007 = vmatpush.bf16.msra.mxu0 %v1397
    %2008 = vmatpush.bf16.msra.mxu0 %v1393
    %2009 = vmatpush.bf16.msra.mxu0 %v1389
    %2010 = vmatpush.bf16.msra.mxu0 %v1385
    %2011 = vmatpush.bf16.msra.mxu0 %v1381
    %2012 = vmatmul.bf16.gmra.mxu0 %v188
    %v2013 = vpop.f32.mrf.mxu0
    %v2014 = vadd.f32 %v2001, %v2013
    %v2015 = vpop.f32.mrf.mxu0
    %2016 = vdwg.mxu0
    %2017 = vmatpush.bf16.msra.mxu0 %v1441
    %2018 = vmatpush.bf16.msra.mxu0 %v1437
    %2019 = vmatpush.bf16.msra.mxu0 %v1433
    %2020 = vmatpush.bf16.msra.mxu0 %v1429
    %2021 = vmatpush.bf16.msra.mxu0 %v1425
    %2022 = vmatpush.bf16.msra.mxu0 %v1421
    %2023 = vmatpush.bf16.msra.mxu0 %v1417
    %2024 = vmatpush.bf16.msra.mxu0 %v1413
    %2025 = vmatmul.bf16.gmra.mxu0 %v189
    %v2026 = vpop.f32.mrf.mxu0
    %v2027 = vadd.f32 %v2014, %v2026
    %v2028 = vpop.f32.mrf.mxu0
    %2029 = vdwg.mxu0
    %2030 = vmatpush.bf16.msra.mxu0 %v1473
    %2031 = vmatpush.bf16.msra.mxu0 %v1469
    %2032 = vmatpush.bf16.msra.mxu0 %v1465
    %2033 = vmatpush.bf16.msra.mxu0 %v1461
    %2034 = vmatpush.bf16.msra.mxu0 %v1457
    %2035 = vmatpush.bf16.msra.mxu0 %v1453
    %2036 = vmatpush.bf16.msra.mxu0 %v1449
    %2037 = vmatpush.bf16.msra.mxu0 %v1445
    %2038 = vmatmul.bf16.gmra.mxu0 %v190
    %v2039 = vpop.f32.mrf.mxu0
    %v2040 = vadd.f32 %v2027, %v2039
    %v2041 = vpop.f32.mrf.mxu0
    %2042 = vdwg.mxu0
    %2043 = vmatpush.bf16.msra.mxu0 %v1250
    %2044 = vmatpush.bf16.msra.mxu0 %v1246
    %2045 = vmatpush.bf16.msra.mxu0 %v1242
    %2046 = vmatpush.bf16.msra.mxu0 %v1238
    %2047 = vmatpush.bf16.msra.mxu0 %v1234
    %2048 = vmatpush.bf16.msra.mxu0 %v1230
    %2049 = vmatpush.bf16.msra.mxu0 %v1226
    %2050 = vmatpush.bf16.msra.mxu0 %v1222
    %2051 = vmatmul.bf16.gmra.mxu0 %v183
    %v2052 = vpop.f32.mrf.mxu0
    %v2053 = vadd.f32 %v450, %v2052
    %v2054 = vpop.f32.mrf.mxu0
    %2055 = vdwg.mxu0
    %2056 = vmatpush.bf16.msra.mxu0 %v1282
    %2057 = vmatpush.bf16.msra.mxu0 %v1278
    %2058 = vmatpush.bf16.msra.mxu0 %v1274
    %2059 = vmatpush.bf16.msra.mxu0 %v1270
    %2060 = vmatpush.bf16.msra.mxu0 %v1266
    %2061 = vmatpush.bf16.msra.mxu0 %v1262
    %2062 = vmatpush.bf16.msra.mxu0 %v1258
    %2063 = vmatpush.bf16.msra.mxu0 %v1254
    %2064 = vmatmul.bf16.gmra.mxu0 %v184
    %v2065 = vpop.f32.mrf.mxu0
    %v2066 = vadd.f32 %v2053, %v2065
    %v2067 = vpop.f32.mrf.mxu0
    %2068 = vdwg.mxu0
    %2069 = vmatpush.bf16.msra.mxu0 %v1314
    %2070 = vmatpush.bf16.msra.mxu0 %v1310
    %2071 = vmatpush.bf16.msra.mxu0 %v1306
    %2072 = vmatpush.bf16.msra.mxu0 %v1302
    %2073 = vmatpush.bf16.msra.mxu0 %v1298
    %2074 = vmatpush.bf16.msra.mxu0 %v1294
    %2075 = vmatpush.bf16.msra.mxu0 %v1290
    %2076 = vmatpush.bf16.msra.mxu0 %v1286
    %2077 = vmatmul.bf16.gmra.mxu0 %v185
    %v2078 = vpop.f32.mrf.mxu0
    %v2079 = vadd.f32 %v2066, %v2078
    %v2080 = vpop.f32.mrf.mxu0
    %2081 = vdwg.mxu0
    %2082 = vmatpush.bf16.msra.mxu0 %v1346
    %2083 = vmatpush.bf16.msra.mxu0 %v1342
    %2084 = vmatpush.bf16.msra.mxu0 %v1338
    %2085 = vmatpush.bf16.msra.mxu0 %v1334
    %2086 = vmatpush.bf16.msra.mxu0 %v1330
    %2087 = vmatpush.bf16.msra.mxu0 %v1326
    %2088 = vmatpush.bf16.msra.mxu0 %v1322
    %2089 = vmatpush.bf16.msra.mxu0 %v1318
    %2090 = vmatmul.bf16.gmra.mxu0 %v186
    %v2091 = vpop.f32.mrf.mxu0
    %v2092 = vadd.f32 %v2079, %v2091
    %v2093 = vpop.f32.mrf.mxu0
    %2094 = vdwg.mxu0
    %2095 = vmatpush.bf16.msra.mxu0 %v1378
    %2096 = vmatpush.bf16.msra.mxu0 %v1374
    %2097 = vmatpush.bf16.msra.mxu0 %v1370
    %2098 = vmatpush.bf16.msra.mxu0 %v1366
    %2099 = vmatpush.bf16.msra.mxu0 %v1362
    %2100 = vmatpush.bf16.msra.mxu0 %v1358
    %2101 = vmatpush.bf16.msra.mxu0 %v1354
    %2102 = vmatpush.bf16.msra.mxu0 %v1350
    %2103 = vmatmul.bf16.gmra.mxu0 %v187
    %v2104 = vpop.f32.mrf.mxu0
    %v2105 = vadd.f32 %v2092, %v2104
    %v2106 = vpop.f32.mrf.mxu0
    %2107 = vdwg.mxu0
    %2108 = vmatpush.bf16.msra.mxu0 %v1410
    %2109 = vmatpush.bf16.msra.mxu0 %v1406
    %2110 = vmatpush.bf16.msra.mxu0 %v1402
    %2111 = vmatpush.bf16.msra.mxu0 %v1398
    %2112 = vmatpush.bf16.msra.mxu0 %v1394
    %2113 = vmatpush.bf16.msra.mxu0 %v1390
    %2114 = vmatpush.bf16.msra.mxu0 %v1386
    %2115 = vmatpush.bf16.msra.mxu0 %v1382
    %2116 = vmatmul.bf16.gmra.mxu0 %v188
    %v2117 = vpop.f32.mrf.mxu0
    %v2118 = vadd.f32 %v2105, %v2117
    %v2119 = vpop.f32.mrf.mxu0
    %2120 = vdwg.mxu0
    %2121 = vmatpush.bf16.msra.mxu0 %v1442
    %2122 = vmatpush.bf16.msra.mxu0 %v1438
    %2123 = vmatpush.bf16.msra.mxu0 %v1434
    %2124 = vmatpush.bf16.msra.mxu0 %v1430
    %2125 = vmatpush.bf16.msra.mxu0 %v1426
    %2126 = vmatpush.bf16.msra.mxu0 %v1422
    %2127 = vmatpush.bf16.msra.mxu0 %v1418
    %2128 = vmatpush.bf16.msra.mxu0 %v1414
    %2129 = vmatmul.bf16.gmra.mxu0 %v189
    %v2130 = vpop.f32.mrf.mxu0
    %v2131 = vadd.f32 %v2118, %v2130
    %v2132 = vpop.f32.mrf.mxu0
    %2133 = vdwg.mxu0
    %2134 = vmatpush.bf16.msra.mxu0 %v1474
    %2135 = vmatpush.bf16.msra.mxu0 %v1470
    %2136 = vmatpush.bf16.msra.mxu0 %v1466
    %2137 = vmatpush.bf16.msra.mxu0 %v1462
    %2138 = vmatpush.bf16.msra.mxu0 %v1458
    %2139 = vmatpush.bf16.msra.mxu0 %v1454
    %2140 = vmatpush.bf16.msra.mxu0 %v1450
    %2141 = vmatpush.bf16.msra.mxu0 %v1446
    %2142 = vmatmul.bf16.gmra.mxu0 %v190
    %v2143 = vpop.f32.mrf.mxu0
    %v2144 = vadd.f32 %v2131, %v2143
    %v2145 = vpop.f32.mrf.mxu0
    %2146 = vdwg.mxu0
    %v2147 = vmax.f32 %v1832, 0.0
    %v2148 = vmax.f32 %v1936, 0.0
    %v2149 = vmax.f32 %v2040, 0.0
    %v2150 = vmax.f32 %v2144, 0.0
    %v2151 = vpack.c.bf16 %v2147, %v2147
    %v2152 = vpack.c.bf16 %v2148, %v2148
    %v2153 = vpack.c.bf16 %v2149, %v2149
    %v2154 = vpack.c.bf16 %v2150, %v2150
    %v2155 = vld [vmem:[#allocation5] sm:$0xff]
    %v2156 = vld [vmem:[#allocation5 + $0x8] sm:$0xff]
    %v2157 = vld [vmem:[#allocation5 + $0x10] sm:$0xff]
    %v2158 = vld [vmem:[#allocation5 + $0x18] sm:$0xff]
    %v2159 = vld [vmem:[#allocation5 + $0x20] sm:$0xff]
    %v2160 = vld [vmem:[#allocation5 + $0x28] sm:$0xff]
    %v2161 = vld [vmem:[#allocation5 + $0x30] sm:$0xff]
    %v2162 = vld [vmem:[#allocation5 + $0x38] sm:$0xff]
    %v2163 = vld [vmem:[#allocation5 + $0x40] sm:$0xff]
    %v2164 = vld [vmem:[#allocation5 + $0x48] sm:$0xff]
    %v2165 = vld [vmem:[#allocation5 + $0x50] sm:$0xff]
    %v2166 = vld [vmem:[#allocation5 + $0x58] sm:$0xff]
    %v2167 = vld [vmem:[#allocation5 + $0x60] sm:$0xff]
    %v2168 = vld [vmem:[#allocation5 + $0x68] sm:$0xff]
    %v2169 = vld [vmem:[#allocation5 + $0x70] sm:$0xff]
    %v2170 = vld [vmem:[#allocation5 + $0x78] sm:$0xff]
    %v2171 = vld [vmem:[#allocation5 + $0x80] sm:$0xff]
    %v2172 = vld [vmem:[#allocation5 + $0x88] sm:$0xff]
    %v2173 = vld [vmem:[#allocation5 + $0x90] sm:$0xff]
    %v2174 = vld [vmem:[#allocation5 + $0x98] sm:$0xff]
    %v2175 = vld [vmem:[#allocation5 + $0xa0] sm:$0xff]
    %v2176 = vld [vmem:[#allocation5 + $0xa8] sm:$0xff]
    %v2177 = vld [vmem:[#allocation5 + $0xb0] sm:$0xff]
    %v2178 = vld [vmem:[#allocation5 + $0xb8] sm:$0xff]
    %v2179 = vld [vmem:[#allocation5 + $0xc0] sm:$0xff]
    %v2180 = vld [vmem:[#allocation5 + $0xc8] sm:$0xff]
    %v2181 = vld [vmem:[#allocation5 + $0xd0] sm:$0xff]
    %v2182 = vld [vmem:[#allocation5 + $0xd8] sm:$0xff]
    %v2183 = vld [vmem:[#allocation5 + $0xe0] sm:$0xff]
    %v2184 = vld [vmem:[#allocation5 + $0xe8] sm:$0xff]
    %v2185 = vld [vmem:[#allocation5 + $0xf0] sm:$0xff]
    %v2186 = vld [vmem:[#allocation5 + $0xf8] sm:$0xff]
    %v2187 = vld [vmem:[#allocation5 + $0x100] sm:$0xff]
    %v2188 = vld [vmem:[#allocation5 + $0x108] sm:$0xff]
    %v2189 = vld [vmem:[#allocation5 + $0x110] sm:$0xff]
    %v2190 = vld [vmem:[#allocation5 + $0x118] sm:$0xff]
    %v2191 = vld [vmem:[#allocation5 + $0x120] sm:$0xff]
    %v2192 = vld [vmem:[#allocation5 + $0x128] sm:$0xff]
    %v2193 = vld [vmem:[#allocation5 + $0x130] sm:$0xff]
    %v2194 = vld [vmem:[#allocation5 + $0x138] sm:$0xff]
    %v2195 = vld [vmem:[#allocation5 + $0x140] sm:$0xff]
    %v2196 = vld [vmem:[#allocation5 + $0x148] sm:$0xff]
    %v2197 = vld [vmem:[#allocation5 + $0x150] sm:$0xff]
    %v2198 = vld [vmem:[#allocation5 + $0x158] sm:$0xff]
    %v2199 = vld [vmem:[#allocation5 + $0x160] sm:$0xff]
    %v2200 = vld [vmem:[#allocation5 + $0x168] sm:$0xff]
    %v2201 = vld [vmem:[#allocation5 + $0x170] sm:$0xff]
    %v2202 = vld [vmem:[#allocation5 + $0x178] sm:$0xff]
    %v2203 = vld [vmem:[#allocation5 + $0x180] sm:$0xff]
    %v2204 = vld [vmem:[#allocation5 + $0x188] sm:$0xff]
    %v2205 = vld [vmem:[#allocation5 + $0x190] sm:$0xff]
    %v2206 = vld [vmem:[#allocation5 + $0x198] sm:$0xff]
    %v2207 = vld [vmem:[#allocation5 + $0x1a0] sm:$0xff]
    %v2208 = vld [vmem:[#allocation5 + $0x1a8] sm:$0xff]
    %v2209 = vld [vmem:[#allocation5 + $0x1b0] sm:$0xff]
    %v2210 = vld [vmem:[#allocation5 + $0x1b8] sm:$0xff]
    %v2211 = vld [vmem:[#allocation5 + $0x1c0] sm:$0xff]
    %v2212 = vld [vmem:[#allocation5 + $0x1c8] sm:$0xff]
    %v2213 = vld [vmem:[#allocation5 + $0x1d0] sm:$0xff]
    %v2214 = vld [vmem:[#allocation5 + $0x1d8] sm:$0xff]
    %v2215 = vld [vmem:[#allocation5 + $0x1e0] sm:$0xff]
    %v2216 = vld [vmem:[#allocation5 + $0x1e8] sm:$0xff]
    %v2217 = vld [vmem:[#allocation5 + $0x1f0] sm:$0xff]
    %v2218 = vld [vmem:[#allocation5 + $0x1f8] sm:$0xff]
    %v2219 = vperm.slane %v54, 6
    %v2220 = vperm.slane %v55, 6
    %v2285 = vunpack.c.l.b16 %v2155
    %v2286 = vunpack.c.h.b16 %v2155
    %v2287 = vunpack.c.l.b16 %v2156
    %v2288 = vunpack.c.h.b16 %v2156
    %v2289 = vunpack.c.l.b16 %v2157
    %v2290 = vunpack.c.h.b16 %v2157
    %v2291 = vunpack.c.l.b16 %v2158
    %v2292 = vunpack.c.h.b16 %v2158
    %v2293 = vunpack.c.l.b16 %v2159
    %v2294 = vunpack.c.h.b16 %v2159
    %v2295 = vunpack.c.l.b16 %v2160
    %v2296 = vunpack.c.h.b16 %v2160
    %v2297 = vunpack.c.l.b16 %v2161
    %v2298 = vunpack.c.h.b16 %v2161
    %v2299 = vunpack.c.l.b16 %v2162
    %v2300 = vunpack.c.h.b16 %v2162
    %v2301 = vunpack.c.l.b16 %v2163
    %v2302 = vunpack.c.h.b16 %v2163
    %v2303 = vunpack.c.l.b16 %v2164
    %v2304 = vunpack.c.h.b16 %v2164
    %v2305 = vunpack.c.l.b16 %v2165
    %v2306 = vunpack.c.h.b16 %v2165
    %v2307 = vunpack.c.l.b16 %v2166
    %v2308 = vunpack.c.h.b16 %v2166
    %v2309 = vunpack.c.l.b16 %v2167
    %v2310 = vunpack.c.h.b16 %v2167
    %v2311 = vunpack.c.l.b16 %v2168
    %v2312 = vunpack.c.h.b16 %v2168
    %v2313 = vunpack.c.l.b16 %v2169
    %v2314 = vunpack.c.h.b16 %v2169
    %v2315 = vunpack.c.l.b16 %v2170
    %v2316 = vunpack.c.h.b16 %v2170
    %v2317 = vunpack.c.l.b16 %v2171
    %v2318 = vunpack.c.h.b16 %v2171
    %v2319 = vunpack.c.l.b16 %v2172
    %v2320 = vunpack.c.h.b16 %v2172
    %v2321 = vunpack.c.l.b16 %v2173
    %v2322 = vunpack.c.h.b16 %v2173
    %v2323 = vunpack.c.l.b16 %v2174
    %v2324 = vunpack.c.h.b16 %v2174
    %v2325 = vunpack.c.l.b16 %v2175
    %v2326 = vunpack.c.h.b16 %v2175
    %v2327 = vunpack.c.l.b16 %v2176
    %v2328 = vunpack.c.h.b16 %v2176
    %v2329 = vunpack.c.l.b16 %v2177
    %v2330 = vunpack.c.h.b16 %v2177
    %v2331 = vunpack.c.l.b16 %v2178
    %v2332 = vunpack.c.h.b16 %v2178
    %v2333 = vunpack.c.l.b16 %v2179
    %v2334 = vunpack.c.h.b16 %v2179
    %v2335 = vunpack.c.l.b16 %v2180
    %v2336 = vunpack.c.h.b16 %v2180
    %v2337 = vunpack.c.l.b16 %v2181
    %v2338 = vunpack.c.h.b16 %v2181
    %v2339 = vunpack.c.l.b16 %v2182
    %v2340 = vunpack.c.h.b16 %v2182
    %v2341 = vunpack.c.l.b16 %v2183
    %v2342 = vunpack.c.h.b16 %v2183
    %v2343 = vunpack.c.l.b16 %v2184
    %v2344 = vunpack.c.h.b16 %v2184
    %v2345 = vunpack.c.l.b16 %v2185
    %v2346 = vunpack.c.h.b16 %v2185
    %v2347 = vunpack.c.l.b16 %v2186
    %v2348 = vunpack.c.h.b16 %v2186
    %v2349 = vunpack.c.l.b16 %v2187
    %v2350 = vunpack.c.h.b16 %v2187
    %v2351 = vunpack.c.l.b16 %v2188
    %v2352 = vunpack.c.h.b16 %v2188
    %v2353 = vunpack.c.l.b16 %v2189
    %v2354 = vunpack.c.h.b16 %v2189
    %v2355 = vunpack.c.l.b16 %v2190
    %v2356 = vunpack.c.h.b16 %v2190
    %v2357 = vunpack.c.l.b16 %v2191
    %v2358 = vunpack.c.h.b16 %v2191
    %v2359 = vunpack.c.l.b16 %v2192
    %v2360 = vunpack.c.h.b16 %v2192
    %v2361 = vunpack.c.l.b16 %v2193
    %v2362 = vunpack.c.h.b16 %v2193
    %v2363 = vunpack.c.l.b16 %v2194
    %v2364 = vunpack.c.h.b16 %v2194
    %v2365 = vunpack.c.l.b16 %v2195
    %v2366 = vunpack.c.h.b16 %v2195
    %v2367 = vunpack.c.l.b16 %v2196
    %v2368 = vunpack.c.h.b16 %v2196
    %v2369 = vunpack.c.l.b16 %v2197
    %v2370 = vunpack.c.h.b16 %v2197
    %v2371 = vunpack.c.l.b16 %v2198
    %v2372 = vunpack.c.h.b16 %v2198
    %v2373 = vunpack.c.l.b16 %v2199
    %v2374 = vunpack.c.h.b16 %v2199
    %v2375 = vunpack.c.l.b16 %v2200
    %v2376 = vunpack.c.h.b16 %v2200
    %v2377 = vunpack.c.l.b16 %v2201
    %v2378 = vunpack.c.h.b16 %v2201
    %v2379 = vunpack.c.l.b16 %v2202
    %v2380 = vunpack.c.h.b16 %v2202
    %v2381 = vunpack.c.l.b16 %v2203
    %v2382 = vunpack.c.h.b16 %v2203
    %v2383 = vunpack.c.l.b16 %v2204
    %v2384 = vunpack.c.h.b16 %v2204
    %v2385 = vunpack.c.l.b16 %v2205
    %v2386 = vunpack.c.h.b16 %v2205
    %v2387 = vunpack.c.l.b16 %v2206
    %v2388 = vunpack.c.h.b16 %v2206
    %v2389 = vunpack.c.l.b16 %v2207
    %v2390 = vunpack.c.h.b16 %v2207
    %v2391 = vunpack.c.l.b16 %v2208
    %v2392 = vunpack.c.h.b16 %v2208
    %v2393 = vunpack.c.l.b16 %v2209
    %v2394 = vunpack.c.h.b16 %v2209
    %v2395 = vunpack.c.l.b16 %v2210
    %v2396 = vunpack.c.h.b16 %v2210
    %v2397 = vunpack.c.l.b16 %v2211
    %v2398 = vunpack.c.h.b16 %v2211
    %v2399 = vunpack.c.l.b16 %v2212
    %v2400 = vunpack.c.h.b16 %v2212
    %v2401 = vunpack.c.l.b16 %v2213
    %v2402 = vunpack.c.h.b16 %v2213
    %v2403 = vunpack.c.l.b16 %v2214
    %v2404 = vunpack.c.h.b16 %v2214
    %v2405 = vunpack.c.l.b16 %v2215
    %v2406 = vunpack.c.h.b16 %v2215
    %v2407 = vunpack.c.l.b16 %v2216
    %v2408 = vunpack.c.h.b16 %v2216
    %v2409 = vunpack.c.l.b16 %v2217
    %v2410 = vunpack.c.h.b16 %v2217
    %v2411 = vunpack.c.l.b16 %v2218
    %v2412 = vunpack.c.h.b16 %v2218
    %v2413 = vpack.c.b16 %v2287, %v2285
    %v2414 = vpack.c.b16 %v2288, %v2286
    %v2415 = vpack.c.b16 %v2291, %v2289
    %v2416 = vpack.c.b16 %v2292, %v2290
    %v2417 = vpack.c.b16 %v2295, %v2293
    %v2418 = vpack.c.b16 %v2296, %v2294
    %v2419 = vpack.c.b16 %v2299, %v2297
    %v2420 = vpack.c.b16 %v2300, %v2298
    %v2421 = vpack.c.b16 %v2303, %v2301
    %v2422 = vpack.c.b16 %v2304, %v2302
    %v2423 = vpack.c.b16 %v2307, %v2305
    %v2424 = vpack.c.b16 %v2308, %v2306
    %v2425 = vpack.c.b16 %v2311, %v2309
    %v2426 = vpack.c.b16 %v2312, %v2310
    %v2427 = vpack.c.b16 %v2315, %v2313
    %v2428 = vpack.c.b16 %v2316, %v2314
    %v2429 = vpack.c.b16 %v2319, %v2317
    %v2430 = vpack.c.b16 %v2320, %v2318
    %v2431 = vpack.c.b16 %v2323, %v2321
    %v2432 = vpack.c.b16 %v2324, %v2322
    %v2433 = vpack.c.b16 %v2327, %v2325
    %v2434 = vpack.c.b16 %v2328, %v2326
    %v2435 = vpack.c.b16 %v2331, %v2329
    %v2436 = vpack.c.b16 %v2332, %v2330
    %v2437 = vpack.c.b16 %v2335, %v2333
    %v2438 = vpack.c.b16 %v2336, %v2334
    %v2439 = vpack.c.b16 %v2339, %v2337
    %v2440 = vpack.c.b16 %v2340, %v2338
    %v2441 = vpack.c.b16 %v2343, %v2341
    %v2442 = vpack.c.b16 %v2344, %v2342
    %v2443 = vpack.c.b16 %v2347, %v2345
    %v2444 = vpack.c.b16 %v2348, %v2346
    %v2445 = vpack.c.b16 %v2351, %v2349
    %v2446 = vpack.c.b16 %v2352, %v2350
    %v2447 = vpack.c.b16 %v2355, %v2353
    %v2448 = vpack.c.b16 %v2356, %v2354
    %v2449 = vpack.c.b16 %v2359, %v2357
    %v2450 = vpack.c.b16 %v2360, %v2358
    %v2451 = vpack.c.b16 %v2363, %v2361
    %v2452 = vpack.c.b16 %v2364, %v2362
    %v2453 = vpack.c.b16 %v2367, %v2365
    %v2454 = vpack.c.b16 %v2368, %v2366
    %v2455 = vpack.c.b16 %v2371, %v2369
    %v2456 = vpack.c.b16 %v2372, %v2370
    %v2457 = vpack.c.b16 %v2375, %v2373
    %v2458 = vpack.c.b16 %v2376, %v2374
    %v2459 = vpack.c.b16 %v2379, %v2377
    %v2460 = vpack.c.b16 %v2380, %v2378
    %v2461 = vpack.c.b16 %v2383, %v2381
    %v2462 = vpack.c.b16 %v2384, %v2382
    %v2463 = vpack.c.b16 %v2387, %v2385
    %v2464 = vpack.c.b16 %v2388, %v2386
    %v2465 = vpack.c.b16 %v2391, %v2389
    %v2466 = vpack.c.b16 %v2392, %v2390
    %v2467 = vpack.c.b16 %v2395, %v2393
    %v2468 = vpack.c.b16 %v2396, %v2394
    %v2469 = vpack.c.b16 %v2399, %v2397
    %v2470 = vpack.c.b16 %v2400, %v2398
    %v2471 = vpack.c.b16 %v2403, %v2401
    %v2472 = vpack.c.b16 %v2404, %v2402
    %v2473 = vpack.c.b16 %v2407, %v2405
    %v2474 = vpack.c.b16 %v2408, %v2406
    %v2475 = vpack.c.b16 %v2411, %v2409
    %v2476 = vpack.c.b16 %v2412, %v2410
    %2541 = vmatpush.bf16.msra.mxu0 %v2427
    %2542 = vmatpush.bf16.msra.mxu0 %v2425
    %2543 = vmatpush.bf16.msra.mxu0 %v2423
    %2544 = vmatpush.bf16.msra.mxu0 %v2421
    %2545 = vmatpush.bf16.msra.mxu0 %v2419
    %2546 = vmatpush.bf16.msra.mxu0 %v2417
    %2547 = vmatpush.bf16.msra.mxu0 %v2415
    %2548 = vmatpush.bf16.msra.mxu0 %v2413
    %2549 = vmatmul.bf16.gmra.mxu0 %v2151
    %v2550 = vpop.f32.mrf.mxu0
    %v2551 = vadd.f32 %v2219, %v2550
    %v2552 = vpop.f32.mrf.mxu0
    %2553 = vdwg.mxu0
    %2554 = vmatpush.bf16.msra.mxu0 %v2443
    %2555 = vmatpush.bf16.msra.mxu0 %v2441
    %2556 = vmatpush.bf16.msra.mxu0 %v2439
    %2557 = vmatpush.bf16.msra.mxu0 %v2437
    %2558 = vmatpush.bf16.msra.mxu0 %v2435
    %2559 = vmatpush.bf16.msra.mxu0 %v2433
    %2560 = vmatpush.bf16.msra.mxu0 %v2431
    %2561 = vmatpush.bf16.msra.mxu0 %v2429
    %2562 = vmatmul.bf16.gmra.mxu0 %v2152
    %v2563 = vpop.f32.mrf.mxu0
    %v2564 = vadd.f32 %v2551, %v2563
    %v2565 = vpop.f32.mrf.mxu0
    %2566 = vdwg.mxu0
    %2567 = vmatpush.bf16.msra.mxu0 %v2459
    %2568 = vmatpush.bf16.msra.mxu0 %v2457
    %2569 = vmatpush.bf16.msra.mxu0 %v2455
    %2570 = vmatpush.bf16.msra.mxu0 %v2453
    %2571 = vmatpush.bf16.msra.mxu0 %v2451
    %2572 = vmatpush.bf16.msra.mxu0 %v2449
    %2573 = vmatpush.bf16.msra.mxu0 %v2447
    %2574 = vmatpush.bf16.msra.mxu0 %v2445
    %2575 = vmatmul.bf16.gmra.mxu0 %v2153
    %v2576 = vpop.f32.mrf.mxu0
    %v2577 = vadd.f32 %v2564, %v2576
    %v2578 = vpop.f32.mrf.mxu0
    %2579 = vdwg.mxu0
    %2580 = vmatpush.bf16.msra.mxu0 %v2475
    %2581 = vmatpush.bf16.msra.mxu0 %v2473
    %2582 = vmatpush.bf16.msra.mxu0 %v2471
    %2583 = vmatpush.bf16.msra.mxu0 %v2469
    %2584 = vmatpush.bf16.msra.mxu0 %v2467
    %2585 = vmatpush.bf16.msra.mxu0 %v2465
    %2586 = vmatpush.bf16.msra.mxu0 %v2463
    %2587 = vmatpush.bf16.msra.mxu0 %v2461
    %2588 = vmatmul.bf16.gmra.mxu0 %v2154
    %v2589 = vpop.f32.mrf.mxu0
    %v2590 = vadd.f32 %v2577, %v2589
    %v2591 = vpop.f32.mrf.mxu0
    %2592 = vdwg.mxu0
    %2593 = vmatpush.bf16.msra.mxu0 %v2428
    %2594 = vmatpush.bf16.msra.mxu0 %v2426
    %2595 = vmatpush.bf16.msra.mxu0 %v2424
    %2596 = vmatpush.bf16.msra.mxu0 %v2422
    %2597 = vmatpush.bf16.msra.mxu0 %v2420
    %2598 = vmatpush.bf16.msra.mxu0 %v2418
    %2599 = vmatpush.bf16.msra.mxu0 %v2416
    %2600 = vmatpush.bf16.msra.mxu0 %v2414
    %2601 = vmatmul.bf16.gmra.mxu0 %v2151
    %v2602 = vpop.f32.mrf.mxu0
    %v2603 = vadd.f32 %v2220, %v2602
    %v2604 = vpop.f32.mrf.mxu0
    %2605 = vdwg.mxu0
    %2606 = vmatpush.bf16.msra.mxu0 %v2444
    %2607 = vmatpush.bf16.msra.mxu0 %v2442
    %2608 = vmatpush.bf16.msra.mxu0 %v2440
    %2609 = vmatpush.bf16.msra.mxu0 %v2438
    %2610 = vmatpush.bf16.msra.mxu0 %v2436
    %2611 = vmatpush.bf16.msra.mxu0 %v2434
    %2612 = vmatpush.bf16.msra.mxu0 %v2432
    %2613 = vmatpush.bf16.msra.mxu0 %v2430
    %2614 = vmatmul.bf16.gmra.mxu0 %v2152
    %v2615 = vpop.f32.mrf.mxu0
    %v2616 = vadd.f32 %v2603, %v2615
    %v2617 = vpop.f32.mrf.mxu0
    %2618 = vdwg.mxu0
    %2619 = vmatpush.bf16.msra.mxu0 %v2460
    %2620 = vmatpush.bf16.msra.mxu0 %v2458
    %2621 = vmatpush.bf16.msra.mxu0 %v2456
    %2622 = vmatpush.bf16.msra.mxu0 %v2454
    %2623 = vmatpush.bf16.msra.mxu0 %v2452
    %2624 = vmatpush.bf16.msra.mxu0 %v2450
    %2625 = vmatpush.bf16.msra.mxu0 %v2448
    %2626 = vmatpush.bf16.msra.mxu0 %v2446
    %2627 = vmatmul.bf16.gmra.mxu0 %v2153
    %v2628 = vpop.f32.mrf.mxu0
    %v2629 = vadd.f32 %v2616, %v2628
    %v2630 = vpop.f32.mrf.mxu0
    %2631 = vdwg.mxu0
    %2632 = vmatpush.bf16.msra.mxu0 %v2476
    %2633 = vmatpush.bf16.msra.mxu0 %v2474
    %2634 = vmatpush.bf16.msra.mxu0 %v2472
    %2635 = vmatpush.bf16.msra.mxu0 %v2470
    %2636 = vmatpush.bf16.msra.mxu0 %v2468
    %2637 = vmatpush.bf16.msra.mxu0 %v2466
    %2638 = vmatpush.bf16.msra.mxu0 %v2464
    %2639 = vmatpush.bf16.msra.mxu0 %v2462
    %2640 = vmatmul.bf16.gmra.mxu0 %v2154
    %v2641 = vpop.f32.mrf.mxu0
    %v2642 = vadd.f32 %v2629, %v2641
    %v2643 = vpop.f32.mrf.mxu0
    %2644 = vdwg.mxu0
    %v2645 = vmax.f32 %v2590, 0.0
    %v2646 = vmax.f32 %v2642, 0.0
    %v2647 = vperm.slane %v54, 7
    %v2648 = vperm.slane %v55, 7
    %v2649 = vmul.f32 %v2645, %v2647
    %v2650 = vmul.f32 %v2646, %v2648
    %v2651 = vadd.f32 %v2649, %v2650
    %2652 = vadd.xlane.f32.xlu0 %v2651
    %v2653 = vpop.xlane.xlu0 %2652
    %s2654 = sld [smem:[#allocation2]]
    %v2655 = vstv %s2654
    %v2656 = vadd.f32 %v2653, %v2655
    %2657 = vst [vmem:[%s5] sm:$0xff] %v2656
    // Predicated region
    $region30: #{model_forward.1} parent=1 // pred_check
      _
    $region31: #{model_forward.1} parent=1 // pred_check_branch
      %2659 = sbr.rel (0) target = $region33
    $region32: #{model_forward.1} parent=1 // pred_region
      _
    $region33: #{model_forward.1} parent=1 // pred_fallthru
      _
    // Predicated region
    $region34: #{model_forward.1} parent=1 // pred_check
      _
    $region35: #{model_forward.1} parent=1 // pred_check_branch
      %2661 = sbr.rel (0) target = $region37
    $region36: #{model_forward.1} parent=1 // pred_region
      _
    $region37: #{model_forward.1} parent=1 // pred_fallthru
      _
    %2662 = vsyncpa [#allocation4], 1
    %2663 = vsyncpa [#allocation6], 1

</llo_original>
